<compile_context>
chip_gen: v7x
topology: tpu7x:2x2x1
jax: 0.10.0
libtpu: 0.0.40
codegen_flags: <defaults>
</compile_context>

<pallas_src>
import jax
import jax.numpy as jnp
from jax.experimental import pallas as pl
from jax.experimental.pallas import tpu as pltpu


def _round_up(n, m):
    return ((n + m - 1) // m) * m


# ----------------------------------------------------------------------------
# Kernel
# ----------------------------------------------------------------------------
def mlp_kernel(x_ref, w1_ref, b1_ref, w2_ref, b2_ref, w3_ref, b3_ref,
               wo_ref, bo_ref, out_ref):
    # x_ref: (TM, K_pad) f32; weights bf16; biases f32 (1, N); out f32 (TM, OUT_pad)
    x = x_ref[...].astype(jnp.bfloat16)   # in-kernel downcast (cheap VPU op)

    # Layer 1: Linear(S*D -> 512pad) + ReLU   (Dropout = identity)
    h = jnp.dot(x, w1_ref[...], preferred_element_type=jnp.float32) + b1_ref[...]
    h = jnp.maximum(h, 0.0)

    # Layer 2: Linear(512 -> 512) + ReLU
    h = jnp.dot(h.astype(jnp.bfloat16), w2_ref[...],
                preferred_element_type=jnp.float32) + b2_ref[...]
    h = jnp.maximum(h, 0.0)

    # Layer 3: Linear(512 -> 512) + ReLU
    h = jnp.dot(h.astype(jnp.bfloat16), w3_ref[...],
                preferred_element_type=jnp.float32) + b3_ref[...]
    h = jnp.maximum(h, 0.0)

    # Output layer: Linear(512 -> 128pad), no activation
    out = jnp.dot(h.astype(jnp.bfloat16), wo_ref[...],
                  preferred_element_type=jnp.float32) + bo_ref[...]
    out_ref[...] = out.astype(out_ref.dtype)


# ----------------------------------------------------------------------------
# One-time parameter preparation (hoisted out of the per-call forward)
# ----------------------------------------------------------------------------
def prepare_params(params):
    """Pad to lane-aligned shapes and cast matmul operands to bf16, ONCE.

    Zero padding is numerically exact: zero input cols x zero weight rows
    contribute nothing, zero-padded biases add 0, and ReLU(0)=0, so padded
    lanes stay zero through every layer.
    """
    K, H = params["w1"].shape
    num_out = params["wo"].shape[1]
    K_pad = _round_up(K, 128)
    H_pad = _round_up(H, 128)          # 500 -> 512
    OUT_pad = _round_up(num_out, 128)  # 10  -> 128

    def pad2(a, r, c):
        return jnp.pad(a, ((0, r - a.shape[0]), (0, c - a.shape[1]))
                       ).astype(jnp.bfloat16)

    def pad_bias(b, n):
        return jnp.pad(b, (0, n - b.shape[0])).reshape(1, -1).astype(jnp.float32)

    return dict(
        w1=pad2(params["w1"], K_pad, H_pad), b1=pad_bias(params["b1"], H_pad),
        w2=pad2(params["w2"], H_pad, H_pad), b2=pad_bias(params["b2"], H_pad),
        w3=pad2(params["w3"], H_pad, H_pad), b3=pad_bias(params["b3"], H_pad),
        wo=pad2(params["wo"], H_pad, OUT_pad), bo=pad_bias(params["bo"], OUT_pad),
        K=K, K_pad=K_pad, H_pad=H_pad, num_out=num_out, OUT_pad=OUT_pad,
    )


# ----------------------------------------------------------------------------
# Batch tiling policy
# ----------------------------------------------------------------------------
def _batch_tiling(B):
    """Return (TM, B_pad, n_tiles).

    - tiny batches (<=16 rows): single tile (grid overhead dominates otherwise)
    - medium batches: split into 2 tiles so the "parallel" grid axis can shard
      across both v7x TensorCores (weights are VMEM-resident, so the only cost
      on 1-TC chips is one extra ~0.35 us grid step)
    - large batches: TM=512 to match the v6e/v7x 256-wide MXU M dimension and
      amortize per-grid-step pipeline overhead
    """
    B_pad8 = _round_up(B, 8)
    if B_pad8 <= 16:
        return B_pad8, B_pad8, 1
    if B_pad8 <= 1024:
        TM = _round_up((B_pad8 + 1) // 2, 8)
        return TM, 2 * TM, 2
    TM = 512
    B_pad = _round_up(B, TM)
    return TM, B_pad, B_pad // TM


# ----------------------------------------------------------------------------
# Forward
# ----------------------------------------------------------------------------
def mlp_classifier_forward(x, prepped):
    """x: (B, S, D) float32.  prepped: output of prepare_params()."""
    B = x.shape[0]
    x_flat = x.reshape(B, -1).astype(jnp.float32)            # nn.Flatten
    K, K_pad = prepped["K"], prepped["K_pad"]
    H_pad, OUT_pad, num_out = prepped["H_pad"], prepped["OUT_pad"], prepped["num_out"]
    assert x_flat.shape[1] == K, (x_flat.shape, K)

    TM, B_pad, n_tiles = _batch_tiling(B)
    if (B_pad, K_pad) != (B, K):
        x_flat = jnp.pad(x_flat, ((0, B_pad - B), (0, K_pad - K)))

    w1, b1 = prepped["w1"], prepped["b1"]
    w2, b2 = prepped["w2"], prepped["b2"]
    w3, b3 = prepped["w3"], prepped["b3"]
    wo, bo = prepped["wo"], prepped["bo"]

    # Weights/biases: constant block index across the batch grid => fetched
    # once, VMEM-resident for all batch tiles.
    resident = lambda a: pl.BlockSpec(a.shape, lambda i: (0,) * a.ndim)

    flops = 2 * B_pad * (K_pad * H_pad + 2 * H_pad * H_pad + H_pad * OUT_pad)
    bytes_accessed = (x_flat.size * 4
                      + (w1.size + w2.size + w3.size + wo.size) * 2
                      + (b1.size + b2.size + b3.size + bo.size) * 4
                      + B_pad * OUT_pad * 4)
    cost = pl.CostEstimate(flops=flops, transcendentals=0,
                           bytes_accessed=bytes_accessed)

    out_pad = pl.pallas_call(
        mlp_kernel,
        out_shape=jax.ShapeDtypeStruct((B_pad, OUT_pad), jnp.float32),
        grid=(n_tiles,),
        in_specs=[
            pl.BlockSpec((TM, K_pad), lambda i: (i, 0)),   # x: tiled over batch
            resident(w1), resident(b1),
            resident(w2), resident(b2),
            resident(w3), resident(b3),
            resident(wo), resident(bo),
        ],
        out_specs=pl.BlockSpec((TM, OUT_pad), lambda i: (i, 0)),
        compiler_params=pltpu.CompilerParams(
            dimension_semantics=("parallel",),   # megacore sharding on v7x
            vmem_limit_bytes=32 << 20,           # headroom for TM=512 / big K
        ),
        cost_estimate=cost,
    )(x_flat, w1, b1, w2, b2, w3, b3, wo, bo)

    # Slice away batch / lane padding (free layout plumbing in the wrapper).
    return out_pad[:B, :num_out]


# ----------------------------------------------------------------------------
# Parameter init (PyTorch nn.Linear default init, (in, out) layout)
# ----------------------------------------------------------------------------
def init_params(key, in_features, hidden, num_classes):
    out_features = num_classes if num_classes > 2 else 1
    keys = jax.random.split(key, 8)

    def linear(kw, kb, fan_in, fan_out):
        bound = 1.0 / jnp.sqrt(fan_in)
        w = jax.random.uniform(kw, (fan_in, fan_out), jnp.float32, -bound, bound)
        b = jax.random.uniform(kb, (fan_out,), jnp.float32, -bound, bound)
        return w, b

    w1, b1 = linear(keys[0], keys[1], in_features, hidden)
    w2, b2 = linear(keys[2], keys[3], hidden, hidden)
    w3, b3 = linear(keys[4], keys[5], hidden, hidden)
    wo, bo = linear(keys[6], keys[7], hidden, out_features)
    return dict(w1=w1, b1=b1, w2=w2, b2=b2, w3=w3, b3=b3, wo=wo, bo=bo)


# ----------------------------------------------------------------------------
# References
# ----------------------------------------------------------------------------
def _reference_bf16(x, params):
    """Mirrors the kernel numerics exactly: bf16 matmul operands, f32 acc/epilogue."""
    def lin(h, w, b):
        return jnp.dot(h.astype(jnp.bfloat16), w.astype(jnp.bfloat16),
                       preferred_element_type=jnp.float32) + b
    h = x.reshape(x.shape[0], -1)
    h = jnp.maximum(lin(h, params["w1"], params["b1"]), 0.0)
    h = jnp.maximum(lin(h, params["w2"], params["b2"]), 0.0)
    h = jnp.maximum(lin(h, params["w3"], params["b3"]), 0.0)
    return lin(h, params["wo"], params["bo"])


def _reference_f32(x, params):
    """True f32 PyTorch nn.Linear semantics (eval mode: dropout = identity)."""
    def lin(h, w, b):
        return jnp.dot(h, w, precision=jax.lax.Precision.HIGHEST) + b
    h = x.reshape(x.shape[0], -1)
    h = jnp.maximum(lin(h, params["w1"], params["b1"]), 0.0)
    h = jnp.maximum(lin(h, params["w2"], params["b2"]), 0.0)
    h = jnp.maximum(lin(h, params["w3"], params["b3"]), 0.0)
    return lin(h, params["wo"], params["bo"])


if __name__ == "__main__":
    # Small, module-consistent shapes: (batch, sequence_len, dimension_num).
    B, S, D = 2, 8, 16
    HIDDEN = 500
    NUM_CLASSES = 10

    key = jax.random.PRNGKey(0)
    kx, kx2, kp = jax.random.split(key, 3)

    params = init_params(kp, S * D, HIDDEN, NUM_CLASSES)
    prepped = prepare_params(params)          # one-time pad + bf16 cast

    # --- single-tile path (tiny batch) ---
    x = jax.random.normal(kx, (B, S, D), dtype=jnp.float32)
    out = mlp_classifier_forward(x, prepped)
    out = jax.block_until_ready(out)
    assert out.shape == (B, NUM_CLASSES), out.shape

    ref = _reference_bf16(x, params)
    assert jnp.allclose(out, ref, atol=2e-3, rtol=2e-3), \
        float(jnp.max(jnp.abs(out - ref)))
    # Sanity check against true f32 PyTorch semantics (bf16 quantization error only).
    ref32 = _reference_f32(x, params)
    assert jnp.allclose(out, ref32, atol=1e-1, rtol=1e-1), \
        float(jnp.max(jnp.abs(out - ref32)))

    # --- multi-tile path (2 batch tiles -> exercises grid + v7x split logic) ---
    B2 = 40
    x2 = jax.random.normal(kx2, (B2, S, D), dtype=jnp.float32)
    out2 = mlp_classifier_forward(x2, prepped)
    out2 = jax.block_until_ready(out2)
    assert out2.shape == (B2, NUM_CLASSES), out2.shape
    ref2 = _reference_bf16(x2, params)
    assert jnp.allclose(out2, ref2, atol=2e-3, rtol=2e-3), \
        float(jnp.max(jnp.abs(out2 - ref2)))

    print("KERNEL_OK")
</pallas_src>

<mosaic_0001>
module attributes {stable_mosaic.version = 11 : i64} {
  func.func @mlp_kernel(%arg0: i32, %arg1: memref<8x128xf32, #tpu.memory_space<vmem>>, %arg2: memref<128x512xbf16, #tpu.memory_space<vmem>>, %arg3: memref<1x512xf32, #tpu.memory_space<vmem>>, %arg4: memref<512x512xbf16, #tpu.memory_space<vmem>>, %arg5: memref<1x512xf32, #tpu.memory_space<vmem>>, %arg6: memref<512x512xbf16, #tpu.memory_space<vmem>>, %arg7: memref<1x512xf32, #tpu.memory_space<vmem>>, %arg8: memref<512x128xbf16, #tpu.memory_space<vmem>>, %arg9: memref<1x128xf32, #tpu.memory_space<vmem>>, %arg10: memref<8x128xf32, #tpu.memory_space<vmem>>) attributes {dimension_semantics = [#tpu.dimension_semantics<parallel>], iteration_bounds = array<i64: 1>, scalar_prefetch = 0 : i64, scratch_operands = 0 : i64, tpu.core_type = #tpu.core_type<tc>, window_params = [{transform_indices = @transform_0, window_bounds = array<i64: 8, 128>}, {pipeline_mode = #tpu.pipeline_mode<synchronous>, transform_indices = @transform_1, window_bounds = array<i64: 128, 512>}, {pipeline_mode = #tpu.pipeline_mode<synchronous>, transform_indices = @transform_2, window_bounds = array<i64: 1, 512>}, {pipeline_mode = #tpu.pipeline_mode<synchronous>, transform_indices = @transform_3, window_bounds = array<i64: 512, 512>}, {pipeline_mode = #tpu.pipeline_mode<synchronous>, transform_indices = @transform_4, window_bounds = array<i64: 1, 512>}, {pipeline_mode = #tpu.pipeline_mode<synchronous>, transform_indices = @transform_5, window_bounds = array<i64: 512, 512>}, {pipeline_mode = #tpu.pipeline_mode<synchronous>, transform_indices = @transform_6, window_bounds = array<i64: 1, 512>}, {pipeline_mode = #tpu.pipeline_mode<synchronous>, transform_indices = @transform_7, window_bounds = array<i64: 512, 128>}, {pipeline_mode = #tpu.pipeline_mode<synchronous>, transform_indices = @transform_8, window_bounds = array<i64: 1, 128>}, {transform_indices = @transform_9, window_bounds = array<i64: 8, 128>}]} {
    %c0 = arith.constant 0 : index
    %c0_0 = arith.constant 0 : index
    %0 = vector.load %arg1[%c0, %c0_0] : memref<8x128xf32, #tpu.memory_space<vmem>>, vector<8x128xf32>
    %1 = arith.truncf %0 : vector<8x128xf32> to vector<8x128xbf16>
    %c0_1 = arith.constant 0 : index
    %c0_2 = arith.constant 0 : index
    %2 = vector.load %arg2[%c0_1, %c0_2] : memref<128x512xbf16, #tpu.memory_space<vmem>>, vector<128x512xbf16>
    %cst = arith.constant dense<0.000000e+00> : vector<8x512xf32>
    %3 = tpu.matmul %1, %2, %cst {dimension_numbers = #tpu.dot_dimension_numbers<[1], [0], [0], [1], [0, 0, 1, 1], [], []>} : vector<8x128xbf16>, vector<128x512xbf16>, vector<8x512xf32> -> vector<8x512xf32>
    %c0_3 = arith.constant 0 : index
    %c0_4 = arith.constant 0 : index
    %4 = vector.load %arg3[%c0_3, %c0_4] : memref<1x512xf32, #tpu.memory_space<vmem>>, vector<1x512xf32>
    %5 = vector.broadcast %4 : vector<1x512xf32> to vector<8x512xf32>
    %6 = arith.addf %3, %5 : vector<8x512xf32>
    %cst_5 = arith.constant 0.000000e+00 : f32
    %7 = vector.broadcast %cst_5 : f32 to vector<8x512xf32>
    %8 = arith.maximumf %6, %7 : vector<8x512xf32>
    %9 = arith.truncf %8 : vector<8x512xf32> to vector<8x512xbf16>
    %c0_6 = arith.constant 0 : index
    %c0_7 = arith.constant 0 : index
    %10 = vector.load %arg4[%c0_6, %c0_7] : memref<512x512xbf16, #tpu.memory_space<vmem>>, vector<512x512xbf16>
    %cst_8 = arith.constant dense<0.000000e+00> : vector<8x512xf32>
    %11 = tpu.matmul %9, %10, %cst_8 {dimension_numbers = #tpu.dot_dimension_numbers<[1], [0], [0], [1], [0, 0, 1, 1], [], []>} : vector<8x512xbf16>, vector<512x512xbf16>, vector<8x512xf32> -> vector<8x512xf32>
    %c0_9 = arith.constant 0 : index
    %c0_10 = arith.constant 0 : index
    %12 = vector.load %arg5[%c0_9, %c0_10] : memref<1x512xf32, #tpu.memory_space<vmem>>, vector<1x512xf32>
    %13 = vector.broadcast %12 : vector<1x512xf32> to vector<8x512xf32>
    %14 = arith.addf %11, %13 : vector<8x512xf32>
    %cst_11 = arith.constant 0.000000e+00 : f32
    %15 = vector.broadcast %cst_11 : f32 to vector<8x512xf32>
    %16 = arith.maximumf %14, %15 : vector<8x512xf32>
    %17 = arith.truncf %16 : vector<8x512xf32> to vector<8x512xbf16>
    %c0_12 = arith.constant 0 : index
    %c0_13 = arith.constant 0 : index
    %18 = vector.load %arg6[%c0_12, %c0_13] : memref<512x512xbf16, #tpu.memory_space<vmem>>, vector<512x512xbf16>
    %cst_14 = arith.constant dense<0.000000e+00> : vector<8x512xf32>
    %19 = tpu.matmul %17, %18, %cst_14 {dimension_numbers = #tpu.dot_dimension_numbers<[1], [0], [0], [1], [0, 0, 1, 1], [], []>} : vector<8x512xbf16>, vector<512x512xbf16>, vector<8x512xf32> -> vector<8x512xf32>
    %c0_15 = arith.constant 0 : index
    %c0_16 = arith.constant 0 : index
    %20 = vector.load %arg7[%c0_15, %c0_16] : memref<1x512xf32, #tpu.memory_space<vmem>>, vector<1x512xf32>
    %21 = vector.broadcast %20 : vector<1x512xf32> to vector<8x512xf32>
    %22 = arith.addf %19, %21 : vector<8x512xf32>
    %cst_17 = arith.constant 0.000000e+00 : f32
    %23 = vector.broadcast %cst_17 : f32 to vector<8x512xf32>
    %24 = arith.maximumf %22, %23 : vector<8x512xf32>
    %25 = arith.truncf %24 : vector<8x512xf32> to vector<8x512xbf16>
    %c0_18 = arith.constant 0 : index
    %c0_19 = arith.constant 0 : index
    %26 = vector.load %arg8[%c0_18, %c0_19] : memref<512x128xbf16, #tpu.memory_space<vmem>>, vector<512x128xbf16>
    %cst_20 = arith.constant dense<0.000000e+00> : vector<8x128xf32>
    %27 = tpu.matmul %25, %26, %cst_20 {dimension_numbers = #tpu.dot_dimension_numbers<[1], [0], [0], [1], [0, 0, 1, 1], [], []>} : vector<8x512xbf16>, vector<512x128xbf16>, vector<8x128xf32> -> vector<8x128xf32>
    %c0_21 = arith.constant 0 : index
    %c0_22 = arith.constant 0 : index
    %28 = vector.load %arg9[%c0_21, %c0_22] : memref<1x128xf32, #tpu.memory_space<vmem>>, vector<1x128xf32>
    %29 = vector.broadcast %28 : vector<1x128xf32> to vector<8x128xf32>
    %30 = arith.addf %27, %29 : vector<8x128xf32>
    %c0_23 = arith.constant 0 : index
    %c0_24 = arith.constant 0 : index
    %31 = vector.load %arg10[%c0_23, %c0_24] : memref<8x128xf32, #tpu.memory_space<vmem>>, vector<8x128xf32>
    tpu.vector_store %arg10[%c0_23, %c0_24], %30 {strides = array<i32>} : memref<8x128xf32, #tpu.memory_space<vmem>>, vector<8x128xf32>,
    return
  }
  func.func @transform_0(%arg0: i32) -> (i32, i32) {
    %c0_i32 = arith.constant 0 : i32
    %c0_i32_0 = arith.constant 0 : i32
    return %arg0, %c0_i32 : i32, i32
  }
  func.func @transform_1(%arg0: i32) -> (i32, i32) {
    %c0_i32 = arith.constant 0 : i32
    %c0_i32_0 = arith.constant 0 : i32
    %c0_i32_1 = arith.constant 0 : i32
    return %c0_i32, %c0_i32_0 : i32, i32
  }
  func.func @transform_2(%arg0: i32) -> (i32, i32) {
    %c0_i32 = arith.constant 0 : i32
    %c0_i32_0 = arith.constant 0 : i32
    %c0_i32_1 = arith.constant 0 : i32
    return %c0_i32, %c0_i32_0 : i32, i32
  }
  func.func @transform_3(%arg0: i32) -> (i32, i32) {
    %c0_i32 = arith.constant 0 : i32
    %c0_i32_0 = arith.constant 0 : i32
    %c0_i32_1 = arith.constant 0 : i32
    return %c0_i32, %c0_i32_0 : i32, i32
  }
  func.func @transform_4(%arg0: i32) -> (i32, i32) {
    %c0_i32 = arith.constant 0 : i32
    %c0_i32_0 = arith.constant 0 : i32
    %c0_i32_1 = arith.constant 0 : i32
    return %c0_i32, %c0_i32_0 : i32, i32
  }
  func.func @transform_5(%arg0: i32) -> (i32, i32) {
    %c0_i32 = arith.constant 0 : i32
    %c0_i32_0 = arith.constant 0 : i32
    %c0_i32_1 = arith.constant 0 : i32
    return %c0_i32, %c0_i32_0 : i32, i32
  }
  func.func @transform_6(%arg0: i32) -> (i32, i32) {
    %c0_i32 = arith.constant 0 : i32
    %c0_i32_0 = arith.constant 0 : i32
    %c0_i32_1 = arith.constant 0 : i32
    return %c0_i32, %c0_i32_0 : i32, i32
  }
  func.func @transform_7(%arg0: i32) -> (i32, i32) {
    %c0_i32 = arith.constant 0 : i32
    %c0_i32_0 = arith.constant 0 : i32
    %c0_i32_1 = arith.constant 0 : i32
    return %c0_i32, %c0_i32_0 : i32, i32
  }
  func.func @transform_8(%arg0: i32) -> (i32, i32) {
    %c0_i32 = arith.constant 0 : i32
    %c0_i32_0 = arith.constant 0 : i32
    %c0_i32_1 = arith.constant 0 : i32
    return %c0_i32, %c0_i32_0 : i32, i32
  }
  func.func @transform_9(%arg0: i32) -> (i32, i32) {
    %c0_i32 = arith.constant 0 : i32
    %c0_i32_0 = arith.constant 0 : i32
    return %arg0, %c0_i32 : i32, i32
  }
}

</mosaic_0001>

<llo_original>
// kernel: tpu_custom_call.1
$region0: #{tpu_custom_call.1}
  #allocation0 [shape = 'u32[]', space=smem, size = 0x4, offset = 0x4, fixed_abs, tag = 'smem constant byte address 0x4 - core index']
  #allocation1 [shape = 'u32[144,128]{1,0:T(1,128)}', space=vmem, size = 0x12000, scoped, tag = 'internal scratch']
  %s0 = inlined_call_operand.hbm [shape: f32[8,128], index: 0, kind: input, shape index: {}]
  %s1 = inlined_call_operand.hbm [shape: bf16[128,512], index: 1, kind: input, shape index: {}]
  %s2 = inlined_call_operand.vmem [shape: f32[1,512], index: 2, kind: input, shape index: {}]
  %s3 = inlined_call_operand.hbm [shape: bf16[512,512], index: 3, kind: input, shape index: {}]
  %s4 = inlined_call_operand.vmem [shape: f32[1,512], index: 4, kind: input, shape index: {}]
  %s5 = inlined_call_operand.hbm [shape: bf16[512,512], index: 5, kind: input, shape index: {}]
  %s6 = inlined_call_operand.vmem [shape: f32[1,512], index: 6, kind: input, shape index: {}]
  %s7 = inlined_call_operand.hbm [shape: bf16[512,128], index: 7, kind: input, shape index: {}]
  %s8 = inlined_call_operand.vmem [shape: f32[1,128], index: 8, kind: input, shape index: {}]
  %s9 = inlined_call_operand.hbm [shape: f32[8,128], index: 9, kind: output, shape index: {}]
  %s10 = sld [smem:[#allocation0]]
  $region66: #{tpu_custom_call.1} parent=0
    _
  %s12 = ssub.s32 1, %s10
  %s13 = scalar_select 0, %s12, %s10
  $region1: #{tpu_custom_call.1} parent=0
    #allocation2 [shape = 'u8[4096]{0}', space=vmem, size = 0x1000, scoped, tag = 'input window, operand 0, single buffered']
    #allocation3 [shape = 's32[1]{0}', space=sflag, size = 0x4, scoped, tag = 'scoped memory for tpu_custom_call.1']
    #allocation4 [shape = 's32[1]{0}', space=sflag, size = 0x4, scoped, tag = 'scoped memory for tpu_custom_call.1']
    #allocation5 [shape = 'u8[131072]{0}', space=vmem, size = 0x20000, scoped, tag = 'input window, operand 1, single buffered']
    #allocation6 [shape = 's32[1]{0}', space=sflag, size = 0x4, scoped, tag = 'scoped memory for tpu_custom_call.1']
    #allocation7 [shape = 'u8[524288]{0}', space=vmem, size = 0x80000, scoped, tag = 'input window, operand 3, single buffered']
    #allocation8 [shape = 'u8[524288]{0}', space=vmem, size = 0x80000, scoped, tag = 'input window, operand 5, single buffered']
    #allocation9 [shape = 's32[1]{0}', space=sflag, size = 0x4, scoped, tag = 'scoped memory for tpu_custom_call.1']
    #allocation10 [shape = 'u8[131072]{0}', space=vmem, size = 0x20000, scoped, tag = 'input window, operand 7, single buffered']
    #allocation11 [shape = 'u8[4096]{0}', space=vmem, size = 0x1000, scoped, tag = 'output window, operand 0, single buffered']
    %14 = vsyncpa [#allocation3], 0
    %15 = vsyncpa [#allocation6], 0
    %16 = vsyncpa [#allocation9], 0
    %17 = vsyncpa [#allocation4], 0
    // Predicated region
    $region2: #{tpu_custom_call.1} parent=1 // pred_check
      _
    $region3: #{tpu_custom_call.1} parent=1 // pred_check_branch
      %19 = sbr.rel (0) target = $region5
    $region4: #{tpu_custom_call.1} parent=1 // pred_region
      %s21 = ssub.s32 128, 128
      %22 = vsyncadd [#allocation3], %s21
      %s24 = sshll.u32 [#allocation2], 4
      %s25 = int_to_ptr.vmem [resolvable:$true] %s24
      %27 = dma.hbm_to_vmem [thread:$0]  %s0, 128, %s25, [#allocation3]
    $region5: #{tpu_custom_call.1} parent=1 // pred_fallthru
      _
    // Predicated region
    $region6: #{tpu_custom_call.1} parent=1 // pred_check
      _
    $region7: #{tpu_custom_call.1} parent=1 // pred_check_branch
      %29 = sbr.rel (0) target = $region9
    $region8: #{tpu_custom_call.1} parent=1 // pred_region
      %s31 = ssub.s32 4096, 4096
      %32 = vsyncadd [#allocation6], %s31
      %s33 = sshll.u32 [#allocation5], 4
      %s34 = int_to_ptr.vmem [resolvable:$true] %s33
      %39 = dma.hbm_to_vmem [thread:$0]  %s1, 4096, %s34, [#allocation6], 256, 256, 16
    $region9: #{tpu_custom_call.1} parent=1 // pred_fallthru
      _
    // Predicated region
    $region10: #{tpu_custom_call.1} parent=1 // pred_check
      _
    $region11: #{tpu_custom_call.1} parent=1 // pred_check_branch
      %41 = sbr.rel (0) target = $region13
    $region12: #{tpu_custom_call.1} parent=1 // pred_region
      _
    $region13: #{tpu_custom_call.1} parent=1 // pred_fallthru
      _
    // Predicated region
    $region14: #{tpu_custom_call.1} parent=1 // pred_check
      _
    $region15: #{tpu_custom_call.1} parent=1 // pred_check_branch
      %43 = sbr.rel (0) target = $region17
    $region16: #{tpu_custom_call.1} parent=1 // pred_region
      %s45 = ssub.s32 16384, 16384
      %46 = vsyncadd [#allocation6], %s45
      %s47 = sshll.u32 [#allocation7], 4
      %s48 = int_to_ptr.vmem [resolvable:$true] %s47
      %53 = dma.hbm_to_vmem [thread:$0]  %s3, 16384, %s48, [#allocation6], 256, 256, 16
    $region17: #{tpu_custom_call.1} parent=1 // pred_fallthru
      _
    // Predicated region
    $region18: #{tpu_custom_call.1} parent=1 // pred_check
      _
    $region19: #{tpu_custom_call.1} parent=1 // pred_check_branch
      %55 = sbr.rel (0) target = $region21
    $region20: #{tpu_custom_call.1} parent=1 // pred_region
      _
    $region21: #{tpu_custom_call.1} parent=1 // pred_fallthru
      _
    // Predicated region
    $region22: #{tpu_custom_call.1} parent=1 // pred_check
      _
    $region23: #{tpu_custom_call.1} parent=1 // pred_check_branch
      %57 = sbr.rel (0) target = $region25
    $region24: #{tpu_custom_call.1} parent=1 // pred_region
      %s59 = ssub.s32 16384, 16384
      %60 = vsyncadd [#allocation9], %s59
      %s61 = sshll.u32 [#allocation8], 4
      %s62 = int_to_ptr.vmem [resolvable:$true] %s61
      %67 = dma.hbm_to_vmem [thread:$0]  %s5, 16384, %s62, [#allocation9], 256, 256, 16
    $region25: #{tpu_custom_call.1} parent=1 // pred_fallthru
      _
    // Predicated region
    $region26: #{tpu_custom_call.1} parent=1 // pred_check
      _
    $region27: #{tpu_custom_call.1} parent=1 // pred_check_branch
      %69 = sbr.rel (0) target = $region29
    $region28: #{tpu_custom_call.1} parent=1 // pred_region
      _
    $region29: #{tpu_custom_call.1} parent=1 // pred_fallthru
      _
    // Predicated region
    $region30: #{tpu_custom_call.1} parent=1 // pred_check
      _
    $region31: #{tpu_custom_call.1} parent=1 // pred_check_branch
      %71 = sbr.rel (0) target = $region33
    $region32: #{tpu_custom_call.1} parent=1 // pred_region
      %s73 = ssub.s32 4096, 4096
      %74 = vsyncadd [#allocation9], %s73
      %s75 = sshll.u32 [#allocation10], 4
      %s76 = int_to_ptr.vmem [resolvable:$true] %s75
      %81 = dma.hbm_to_vmem [thread:$0]  %s7, 4096, %s76, [#allocation9], 64, 64, 4
    $region33: #{tpu_custom_call.1} parent=1 // pred_fallthru
      _
    // Predicated region
    $region34: #{tpu_custom_call.1} parent=1 // pred_check
      _
    $region35: #{tpu_custom_call.1} parent=1 // pred_check_branch
      %83 = sbr.rel (0) target = $region37
    $region36: #{tpu_custom_call.1} parent=1 // pred_region
      _
    $region37: #{tpu_custom_call.1} parent=1 // pred_fallthru
      _
    // Predicated region
    $region38: #{tpu_custom_call.1} parent=1 // pred_check
      _
    $region39: #{tpu_custom_call.1} parent=1 // pred_check_branch
      %85 = sbr.rel (0) target = $region41
    $region40: #{tpu_custom_call.1} parent=1 // pred_region
      %86 = dma.done [#allocation3], 128
    $region41: #{tpu_custom_call.1} parent=1 // pred_fallthru
      _
    // Predicated region
    $region42: #{tpu_custom_call.1} parent=1 // pred_check
      _
    $region43: #{tpu_custom_call.1} parent=1 // pred_check_branch
      %88 = sbr.rel (0) target = $region45
    $region44: #{tpu_custom_call.1} parent=1 // pred_region
      %89 = dma.done [#allocation6], 4096
    $region45: #{tpu_custom_call.1} parent=1 // pred_fallthru
      _
    // Predicated region
    $region46: #{tpu_custom_call.1} parent=1 // pred_check
      _
    $region47: #{tpu_custom_call.1} parent=1 // pred_check_branch
      %91 = sbr.rel (0) target = $region49
    $region48: #{tpu_custom_call.1} parent=1 // pred_region
      %92 = dma.done [#allocation6], 16384
    $region49: #{tpu_custom_call.1} parent=1 // pred_fallthru
      _
    // Predicated region
    $region50: #{tpu_custom_call.1} parent=1 // pred_check
      _
    $region51: #{tpu_custom_call.1} parent=1 // pred_check_branch
      %94 = sbr.rel (0) target = $region53
    $region52: #{tpu_custom_call.1} parent=1 // pred_region
      %95 = dma.done [#allocation9], 16384
    $region53: #{tpu_custom_call.1} parent=1 // pred_fallthru
      _
    // Predicated region
    $region54: #{tpu_custom_call.1} parent=1 // pred_check
      _
    $region55: #{tpu_custom_call.1} parent=1 // pred_check_branch
      %97 = sbr.rel (0) target = $region57
    $region56: #{tpu_custom_call.1} parent=1 // pred_region
      %98 = dma.done [#allocation9], 4096
    $region57: #{tpu_custom_call.1} parent=1 // pred_fallthru
      _
    %v100 = vld [vmem:[#allocation2] sm:$0xff]
    %v101 = vpack.c.bf16 %v100, %v100
    %v102 = vld [vmem:[#allocation5] sm:$0xff]
    %v103 = vld [vmem:[#allocation5 + $0x8] sm:$0xff]
    %v104 = vld [vmem:[#allocation5 + $0x10] sm:$0xff]
    %v105 = vld [vmem:[#allocation5 + $0x18] sm:$0xff]
    %v106 = vld [vmem:[#allocation5 + $0x20] sm:$0xff]
    %v107 = vld [vmem:[#allocation5 + $0x28] sm:$0xff]
    %v108 = vld [vmem:[#allocation5 + $0x30] sm:$0xff]
    %v109 = vld [vmem:[#allocation5 + $0x38] sm:$0xff]
    %v110 = vld [vmem:[#allocation5 + $0x40] sm:$0xff]
    %v111 = vld [vmem:[#allocation5 + $0x48] sm:$0xff]
    %v112 = vld [vmem:[#allocation5 + $0x50] sm:$0xff]
    %v113 = vld [vmem:[#allocation5 + $0x58] sm:$0xff]
    %v114 = vld [vmem:[#allocation5 + $0x60] sm:$0xff]
    %v115 = vld [vmem:[#allocation5 + $0x68] sm:$0xff]
    %v116 = vld [vmem:[#allocation5 + $0x70] sm:$0xff]
    %v117 = vld [vmem:[#allocation5 + $0x78] sm:$0xff]
    %v118 = vld [vmem:[#allocation5 + $0x80] sm:$0xff]
    %v119 = vld [vmem:[#allocation5 + $0x88] sm:$0xff]
    %v120 = vld [vmem:[#allocation5 + $0x90] sm:$0xff]
    %v121 = vld [vmem:[#allocation5 + $0x98] sm:$0xff]
    %v122 = vld [vmem:[#allocation5 + $0xa0] sm:$0xff]
    %v123 = vld [vmem:[#allocation5 + $0xa8] sm:$0xff]
    %v124 = vld [vmem:[#allocation5 + $0xb0] sm:$0xff]
    %v125 = vld [vmem:[#allocation5 + $0xb8] sm:$0xff]
    %v126 = vld [vmem:[#allocation5 + $0xc0] sm:$0xff]
    %v127 = vld [vmem:[#allocation5 + $0xc8] sm:$0xff]
    %v128 = vld [vmem:[#allocation5 + $0xd0] sm:$0xff]
    %v129 = vld [vmem:[#allocation5 + $0xd8] sm:$0xff]
    %v130 = vld [vmem:[#allocation5 + $0xe0] sm:$0xff]
    %v131 = vld [vmem:[#allocation5 + $0xe8] sm:$0xff]
    %v132 = vld [vmem:[#allocation5 + $0xf0] sm:$0xff]
    %v133 = vld [vmem:[#allocation5 + $0xf8] sm:$0xff]
    %v134 = vld [vmem:[%s2] sm:$0xf]
    %v136 = vlaneseq
    %v137 = vshrl.u32 %v136, 7
    %v138 = vsub.s32 0, %v137
    %v139 = vrot.slane %v134, %v138
    %v140 = vlaneseq
    %v141 = vshrl.u32 %v140, 7
    %v142 = vsub.s32 1, %v141
    %v143 = vrot.slane %v134, %v142
    %v144 = vlaneseq
    %v145 = vshrl.u32 %v144, 7
    %v146 = vsub.s32 2, %v145
    %v147 = vrot.slane %v134, %v146
    %v148 = vlaneseq
    %v149 = vshrl.u32 %v148, 7
    %v150 = vsub.s32 3, %v149
    %v151 = vrot.slane %v134, %v150
    %v188 = vunpack.c.l.b16 %v102
    %v189 = vunpack.c.h.b16 %v102
    %v190 = vunpack.c.l.b16 %v103
    %v191 = vunpack.c.h.b16 %v103
    %v192 = vunpack.c.l.b16 %v104
    %v193 = vunpack.c.h.b16 %v104
    %v194 = vunpack.c.l.b16 %v105
    %v195 = vunpack.c.h.b16 %v105
    %v196 = vunpack.c.l.b16 %v106
    %v197 = vunpack.c.h.b16 %v106
    %v198 = vunpack.c.l.b16 %v107
    %v199 = vunpack.c.h.b16 %v107
    %v200 = vunpack.c.l.b16 %v108
    %v201 = vunpack.c.h.b16 %v108
    %v202 = vunpack.c.l.b16 %v109
    %v203 = vunpack.c.h.b16 %v109
    %v204 = vunpack.c.l.b16 %v110
    %v205 = vunpack.c.h.b16 %v110
    %v206 = vunpack.c.l.b16 %v111
    %v207 = vunpack.c.h.b16 %v111
    %v208 = vunpack.c.l.b16 %v112
    %v209 = vunpack.c.h.b16 %v112
    %v210 = vunpack.c.l.b16 %v113
    %v211 = vunpack.c.h.b16 %v113
    %v212 = vunpack.c.l.b16 %v114
    %v213 = vunpack.c.h.b16 %v114
    %v214 = vunpack.c.l.b16 %v115
    %v215 = vunpack.c.h.b16 %v115
    %v216 = vunpack.c.l.b16 %v116
    %v217 = vunpack.c.h.b16 %v116
    %v218 = vunpack.c.l.b16 %v117
    %v219 = vunpack.c.h.b16 %v117
    %v220 = vunpack.c.l.b16 %v118
    %v221 = vunpack.c.h.b16 %v118
    %v222 = vunpack.c.l.b16 %v119
    %v223 = vunpack.c.h.b16 %v119
    %v224 = vunpack.c.l.b16 %v120
    %v225 = vunpack.c.h.b16 %v120
    %v226 = vunpack.c.l.b16 %v121
    %v227 = vunpack.c.h.b16 %v121
    %v228 = vunpack.c.l.b16 %v122
    %v229 = vunpack.c.h.b16 %v122
    %v230 = vunpack.c.l.b16 %v123
    %v231 = vunpack.c.h.b16 %v123
    %v232 = vunpack.c.l.b16 %v124
    %v233 = vunpack.c.h.b16 %v124
    %v234 = vunpack.c.l.b16 %v125
    %v235 = vunpack.c.h.b16 %v125
    %v236 = vunpack.c.l.b16 %v126
    %v237 = vunpack.c.h.b16 %v126
    %v238 = vunpack.c.l.b16 %v127
    %v239 = vunpack.c.h.b16 %v127
    %v240 = vunpack.c.l.b16 %v128
    %v241 = vunpack.c.h.b16 %v128
    %v242 = vunpack.c.l.b16 %v129
    %v243 = vunpack.c.h.b16 %v129
    %v244 = vunpack.c.l.b16 %v130
    %v245 = vunpack.c.h.b16 %v130
    %v246 = vunpack.c.l.b16 %v131
    %v247 = vunpack.c.h.b16 %v131
    %v248 = vunpack.c.l.b16 %v132
    %v249 = vunpack.c.h.b16 %v132
    %v250 = vunpack.c.l.b16 %v133
    %v251 = vunpack.c.h.b16 %v133
    %v252 = vpack.c.b16 %v192, %v188
    %v253 = vpack.c.b16 %v193, %v189
    %v254 = vpack.c.b16 %v194, %v190
    %v255 = vpack.c.b16 %v195, %v191
    %v256 = vpack.c.b16 %v200, %v196
    %v257 = vpack.c.b16 %v201, %v197
    %v258 = vpack.c.b16 %v202, %v198
    %v259 = vpack.c.b16 %v203, %v199
    %v260 = vpack.c.b16 %v208, %v204
    %v261 = vpack.c.b16 %v209, %v205
    %v262 = vpack.c.b16 %v210, %v206
    %v263 = vpack.c.b16 %v211, %v207
    %v264 = vpack.c.b16 %v216, %v212
    %v265 = vpack.c.b16 %v217, %v213
    %v266 = vpack.c.b16 %v218, %v214
    %v267 = vpack.c.b16 %v219, %v215
    %v268 = vpack.c.b16 %v224, %v220
    %v269 = vpack.c.b16 %v225, %v221
    %v270 = vpack.c.b16 %v226, %v222
    %v271 = vpack.c.b16 %v227, %v223
    %v272 = vpack.c.b16 %v232, %v228
    %v273 = vpack.c.b16 %v233, %v229
    %v274 = vpack.c.b16 %v234, %v230
    %v275 = vpack.c.b16 %v235, %v231
    %v276 = vpack.c.b16 %v240, %v236
    %v277 = vpack.c.b16 %v241, %v237
    %v278 = vpack.c.b16 %v242, %v238
    %v279 = vpack.c.b16 %v243, %v239
    %v280 = vpack.c.b16 %v248, %v244
    %v281 = vpack.c.b16 %v249, %v245
    %v282 = vpack.c.b16 %v250, %v246
    %v283 = vpack.c.b16 %v251, %v247
    %316 = vmatprep.subr.bf16.mxu0 %v253
    %317 = vmatpush1.bf16.msra.mxu0 %v252
    %318 = vmatprep.subr.bf16.mxu0 %v257
    %319 = vmatpush1.bf16.msra.mxu0 %v256
    %320 = vmatprep.subr.bf16.mxu0 %v261
    %321 = vmatpush1.bf16.msra.mxu0 %v260
    %322 = vmatprep.subr.bf16.mxu0 %v265
    %323 = vmatpush1.bf16.msra.mxu0 %v264
    %324 = vmatprep.subr.bf16.mxu0 %v269
    %325 = vmatpush1.bf16.msra.mxu0 %v268
    %326 = vmatprep.subr.bf16.mxu0 %v273
    %327 = vmatpush1.bf16.msra.mxu0 %v272
    %328 = vmatprep.subr.bf16.mxu0 %v277
    %329 = vmatpush1.bf16.msra.mxu0 %v276
    %330 = vmatprep.subr.bf16.mxu0 %v281
    %331 = vmatpush1.bf16.msra.mxu0 %v280
    %332 = vmatprep.subr.bf16.mxu0 0
    %333 = vmatpush1.bf16.msra.mxu0 0
    %334 = vmatprep.subr.bf16.mxu0 0
    %335 = vmatpush1.bf16.msra.mxu0 0
    %336 = vmatprep.subr.bf16.mxu0 0
    %337 = vmatpush1.bf16.msra.mxu0 0
    %338 = vmatprep.subr.bf16.mxu0 0
    %339 = vmatpush1.bf16.msra.mxu0 0
    %340 = vmatprep.subr.bf16.mxu0 0
    %341 = vmatpush1.bf16.msra.mxu0 0
    %342 = vmatprep.subr.bf16.mxu0 0
    %343 = vmatpush1.bf16.msra.mxu0 0
    %344 = vmatprep.subr.bf16.mxu0 0
    %345 = vmatpush1.bf16.msra.mxu0 0
    %346 = vmatprep.subr.bf16.mxu0 0
    %347 = vmatpush1.bf16.msra.mxu0 0
    %348 = vmatprep.mubr.bf16.mxu0 0
    %349 = vmatmul.mubr.bf16.gmra.mrb[0].mxu0 %v101
    %v350 = vpop.f32.mrb[0].mxu0
    %v351 = vadd.f32 %v139, %v350
    %v352 = vpop.f32.mrb[0].mxu0
    %v353 = vadd.f32 %v143, %v352
    %v354 = vpop.f32.mrb[0].mxu0
    %v355 = vpop.f32.mrb[0].mxu0
    %356 = vdwg.mxu0
    %357 = vmatprep.subr.bf16.mxu0 %v255
    %358 = vmatpush1.bf16.msra.mxu0 %v254
    %359 = vmatprep.subr.bf16.mxu0 %v259
    %360 = vmatpush1.bf16.msra.mxu0 %v258
    %361 = vmatprep.subr.bf16.mxu0 %v263
    %362 = vmatpush1.bf16.msra.mxu0 %v262
    %363 = vmatprep.subr.bf16.mxu0 %v267
    %364 = vmatpush1.bf16.msra.mxu0 %v266
    %365 = vmatprep.subr.bf16.mxu0 %v271
    %366 = vmatpush1.bf16.msra.mxu0 %v270
    %367 = vmatprep.subr.bf16.mxu0 %v275
    %368 = vmatpush1.bf16.msra.mxu0 %v274
    %369 = vmatprep.subr.bf16.mxu0 %v279
    %370 = vmatpush1.bf16.msra.mxu0 %v278
    %371 = vmatprep.subr.bf16.mxu0 %v283
    %372 = vmatpush1.bf16.msra.mxu0 %v282
    %373 = vmatprep.subr.bf16.mxu0 0
    %374 = vmatpush1.bf16.msra.mxu0 0
    %375 = vmatprep.subr.bf16.mxu0 0
    %376 = vmatpush1.bf16.msra.mxu0 0
    %377 = vmatprep.subr.bf16.mxu0 0
    %378 = vmatpush1.bf16.msra.mxu0 0
    %379 = vmatprep.subr.bf16.mxu0 0
    %380 = vmatpush1.bf16.msra.mxu0 0
    %381 = vmatprep.subr.bf16.mxu0 0
    %382 = vmatpush1.bf16.msra.mxu0 0
    %383 = vmatprep.subr.bf16.mxu0 0
    %384 = vmatpush1.bf16.msra.mxu0 0
    %385 = vmatprep.subr.bf16.mxu0 0
    %386 = vmatpush1.bf16.msra.mxu0 0
    %387 = vmatprep.subr.bf16.mxu0 0
    %388 = vmatpush1.bf16.msra.mxu0 0
    %389 = vmatprep.mubr.bf16.mxu0 0
    %390 = vmatmul.mubr.bf16.gmra.mrb[0].mxu0 %v101
    %v391 = vpop.f32.mrb[0].mxu0
    %v392 = vadd.f32 %v147, %v391
    %v393 = vpop.f32.mrb[0].mxu0
    %v394 = vadd.f32 %v151, %v393
    %v395 = vpop.f32.mrb[0].mxu0
    %v396 = vpop.f32.mrb[0].mxu0
    %397 = vdwg.mxu0
    %v398 = vmax.f32 %v351, 0.0
    %v399 = vmax.f32 %v353, 0.0
    %v400 = vmax.f32 %v392, 0.0
    %v401 = vmax.f32 %v394, 0.0
    %v402 = vpack.c.bf16 %v398, %v398
    %v403 = vpack.c.bf16 %v399, %v399
    %v404 = vpack.c.bf16 %v400, %v400
    %v405 = vpack.c.bf16 %v401, %v401
    %v406 = vld [vmem:[#allocation7] sm:$0xff]
    %v407 = vld [vmem:[#allocation7 + $0x8] sm:$0xff]
    %v408 = vld [vmem:[#allocation7 + $0x10] sm:$0xff]
    %v409 = vld [vmem:[#allocation7 + $0x18] sm:$0xff]
    %v410 = vld [vmem:[#allocation7 + $0x20] sm:$0xff]
    %v411 = vld [vmem:[#allocation7 + $0x28] sm:$0xff]
    %v412 = vld [vmem:[#allocation7 + $0x30] sm:$0xff]
    %v413 = vld [vmem:[#allocation7 + $0x38] sm:$0xff]
    %v414 = vld [vmem:[#allocation7 + $0x40] sm:$0xff]
    %v415 = vld [vmem:[#allocation7 + $0x48] sm:$0xff]
    %v416 = vld [vmem:[#allocation7 + $0x50] sm:$0xff]
    %v417 = vld [vmem:[#allocation7 + $0x58] sm:$0xff]
    %v418 = vld [vmem:[#allocation7 + $0x60] sm:$0xff]
    %v419 = vld [vmem:[#allocation7 + $0x68] sm:$0xff]
    %v420 = vld [vmem:[#allocation7 + $0x70] sm:$0xff]
    %v421 = vld [vmem:[#allocation7 + $0x78] sm:$0xff]
    %v422 = vld [vmem:[#allocation7 + $0x80] sm:$0xff]
    %v423 = vld [vmem:[#allocation7 + $0x88] sm:$0xff]
    %v424 = vld [vmem:[#allocation7 + $0x90] sm:$0xff]
    %v425 = vld [vmem:[#allocation7 + $0x98] sm:$0xff]
    %v426 = vld [vmem:[#allocation7 + $0xa0] sm:$0xff]
    %v427 = vld [vmem:[#allocation7 + $0xa8] sm:$0xff]
    %v428 = vld [vmem:[#allocation7 + $0xb0] sm:$0xff]
    %v429 = vld [vmem:[#allocation7 + $0xb8] sm:$0xff]
    %v430 = vld [vmem:[#allocation7 + $0xc0] sm:$0xff]
    %v431 = vld [vmem:[#allocation7 + $0xc8] sm:$0xff]
    %v432 = vld [vmem:[#allocation7 + $0xd0] sm:$0xff]
    %v433 = vld [vmem:[#allocation7 + $0xd8] sm:$0xff]
    %v434 = vld [vmem:[#allocation7 + $0xe0] sm:$0xff]
    %v435 = vld [vmem:[#allocation7 + $0xe8] sm:$0xff]
    %v436 = vld [vmem:[#allocation7 + $0xf0] sm:$0xff]
    %v437 = vld [vmem:[#allocation7 + $0xf8] sm:$0xff]
    %v438 = vld [vmem:[#allocation7 + $0x100] sm:$0xff]
    %v439 = vld [vmem:[#allocation7 + $0x108] sm:$0xff]
    %v440 = vld [vmem:[#allocation7 + $0x110] sm:$0xff]
    %v441 = vld [vmem:[#allocation7 + $0x118] sm:$0xff]
    %v442 = vld [vmem:[#allocation7 + $0x120] sm:$0xff]
    %v443 = vld [vmem:[#allocation7 + $0x128] sm:$0xff]
    %v444 = vld [vmem:[#allocation7 + $0x130] sm:$0xff]
    %v445 = vld [vmem:[#allocation7 + $0x138] sm:$0xff]
    %v446 = vld [vmem:[#allocation7 + $0x140] sm:$0xff]
    %v447 = vld [vmem:[#allocation7 + $0x148] sm:$0xff]
    %v448 = vld [vmem:[#allocation7 + $0x150] sm:$0xff]
    %v449 = vld [vmem:[#allocation7 + $0x158] sm:$0xff]
    %v450 = vld [vmem:[#allocation7 + $0x160] sm:$0xff]
    %v451 = vld [vmem:[#allocation7 + $0x168] sm:$0xff]
    %v452 = vld [vmem:[#allocation7 + $0x170] sm:$0xff]
    %v453 = vld [vmem:[#allocation7 + $0x178] sm:$0xff]
    %v454 = vld [vmem:[#allocation7 + $0x180] sm:$0xff]
    %v455 = vld [vmem:[#allocation7 + $0x188] sm:$0xff]
    %v456 = vld [vmem:[#allocation7 + $0x190] sm:$0xff]
    %v457 = vld [vmem:[#allocation7 + $0x198] sm:$0xff]
    %v458 = vld [vmem:[#allocation7 + $0x1a0] sm:$0xff]
    %v459 = vld [vmem:[#allocation7 + $0x1a8] sm:$0xff]
    %v460 = vld [vmem:[#allocation7 + $0x1b0] sm:$0xff]
    %v461 = vld [vmem:[#allocation7 + $0x1b8] sm:$0xff]
    %v462 = vld [vmem:[#allocation7 + $0x1c0] sm:$0xff]
    %v463 = vld [vmem:[#allocation7 + $0x1c8] sm:$0xff]
    %v464 = vld [vmem:[#allocation7 + $0x1d0] sm:$0xff]
    %v465 = vld [vmem:[#allocation7 + $0x1d8] sm:$0xff]
    %v466 = vld [vmem:[#allocation7 + $0x1e0] sm:$0xff]
    %v467 = vld [vmem:[#allocation7 + $0x1e8] sm:$0xff]
    %v468 = vld [vmem:[#allocation7 + $0x1f0] sm:$0xff]
    %v469 = vld [vmem:[#allocation7 + $0x1f8] sm:$0xff]
    %v470 = vld [vmem:[#allocation7 + $0x200] sm:$0xff]
    %v471 = vld [vmem:[#allocation7 + $0x208] sm:$0xff]
    %v472 = vld [vmem:[#allocation7 + $0x210] sm:$0xff]
    %v473 = vld [vmem:[#allocation7 + $0x218] sm:$0xff]
    %v474 = vld [vmem:[#allocation7 + $0x220] sm:$0xff]
    %v475 = vld [vmem:[#allocation7 + $0x228] sm:$0xff]
    %v476 = vld [vmem:[#allocation7 + $0x230] sm:$0xff]
    %v477 = vld [vmem:[#allocation7 + $0x238] sm:$0xff]
    %v478 = vld [vmem:[#allocation7 + $0x240] sm:$0xff]
    %v479 = vld [vmem:[#allocation7 + $0x248] sm:$0xff]
    %v480 = vld [vmem:[#allocation7 + $0x250] sm:$0xff]
    %v481 = vld [vmem:[#allocation7 + $0x258] sm:$0xff]
    %v482 = vld [vmem:[#allocation7 + $0x260] sm:$0xff]
    %v483 = vld [vmem:[#allocation7 + $0x268] sm:$0xff]
    %v484 = vld [vmem:[#allocation7 + $0x270] sm:$0xff]
    %v485 = vld [vmem:[#allocation7 + $0x278] sm:$0xff]
    %v486 = vld [vmem:[#allocation7 + $0x280] sm:$0xff]
    %v487 = vld [vmem:[#allocation7 + $0x288] sm:$0xff]
    %v488 = vld [vmem:[#allocation7 + $0x290] sm:$0xff]
    %v489 = vld [vmem:[#allocation7 + $0x298] sm:$0xff]
    %v490 = vld [vmem:[#allocation7 + $0x2a0] sm:$0xff]
    %v491 = vld [vmem:[#allocation7 + $0x2a8] sm:$0xff]
    %v492 = vld [vmem:[#allocation7 + $0x2b0] sm:$0xff]
    %v493 = vld [vmem:[#allocation7 + $0x2b8] sm:$0xff]
    %v494 = vld [vmem:[#allocation7 + $0x2c0] sm:$0xff]
    %v495 = vld [vmem:[#allocation7 + $0x2c8] sm:$0xff]
    %v496 = vld [vmem:[#allocation7 + $0x2d0] sm:$0xff]
    %v497 = vld [vmem:[#allocation7 + $0x2d8] sm:$0xff]
    %v498 = vld [vmem:[#allocation7 + $0x2e0] sm:$0xff]
    %v499 = vld [vmem:[#allocation7 + $0x2e8] sm:$0xff]
    %v500 = vld [vmem:[#allocation7 + $0x2f0] sm:$0xff]
    %v501 = vld [vmem:[#allocation7 + $0x2f8] sm:$0xff]
    %v502 = vld [vmem:[#allocation7 + $0x300] sm:$0xff]
    %v503 = vld [vmem:[#allocation7 + $0x308] sm:$0xff]
    %v504 = vld [vmem:[#allocation7 + $0x310] sm:$0xff]
    %v505 = vld [vmem:[#allocation7 + $0x318] sm:$0xff]
    %v506 = vld [vmem:[#allocation7 + $0x320] sm:$0xff]
    %v507 = vld [vmem:[#allocation7 + $0x328] sm:$0xff]
    %v508 = vld [vmem:[#allocation7 + $0x330] sm:$0xff]
    %v509 = vld [vmem:[#allocation7 + $0x338] sm:$0xff]
    %v510 = vld [vmem:[#allocation7 + $0x340] sm:$0xff]
    %v511 = vld [vmem:[#allocation7 + $0x348] sm:$0xff]
    %v512 = vld [vmem:[#allocation7 + $0x350] sm:$0xff]
    %v513 = vld [vmem:[#allocation7 + $0x358] sm:$0xff]
    %v514 = vld [vmem:[#allocation7 + $0x360] sm:$0xff]
    %v515 = vld [vmem:[#allocation7 + $0x368] sm:$0xff]
    %v516 = vld [vmem:[#allocation7 + $0x370] sm:$0xff]
    %v517 = vld [vmem:[#allocation7 + $0x378] sm:$0xff]
    %v518 = vld [vmem:[#allocation7 + $0x380] sm:$0xff]
    %v519 = vld [vmem:[#allocation7 + $0x388] sm:$0xff]
    %v520 = vld [vmem:[#allocation7 + $0x390] sm:$0xff]
    %v521 = vld [vmem:[#allocation7 + $0x398] sm:$0xff]
    %v522 = vld [vmem:[#allocation7 + $0x3a0] sm:$0xff]
    %v523 = vld [vmem:[#allocation7 + $0x3a8] sm:$0xff]
    %v524 = vld [vmem:[#allocation7 + $0x3b0] sm:$0xff]
    %v525 = vld [vmem:[#allocation7 + $0x3b8] sm:$0xff]
    %v526 = vld [vmem:[#allocation7 + $0x3c0] sm:$0xff]
    %v527 = vld [vmem:[#allocation7 + $0x3c8] sm:$0xff]
    %v528 = vld [vmem:[#allocation7 + $0x3d0] sm:$0xff]
    %v529 = vld [vmem:[#allocation7 + $0x3d8] sm:$0xff]
    %v530 = vld [vmem:[#allocation7 + $0x3e0] sm:$0xff]
    %v531 = vld [vmem:[#allocation7 + $0x3e8] sm:$0xff]
    %v532 = vld [vmem:[#allocation7 + $0x3f0] sm:$0xff]
    %v533 = vld [vmem:[#allocation7 + $0x3f8] sm:$0xff]
    %v534 = vld [vmem:[%s4] sm:$0xf]
    %v536 = vlaneseq
    %v537 = vshrl.u32 %v536, 7
    %v538 = vsub.s32 0, %v537
    %v539 = vrot.slane %v534, %v538
    %v540 = vlaneseq
    %v541 = vshrl.u32 %v540, 7
    %v542 = vsub.s32 1, %v541
    %v543 = vrot.slane %v534, %v542
    %v544 = vlaneseq
    %v545 = vshrl.u32 %v544, 7
    %v546 = vsub.s32 2, %v545
    %v547 = vrot.slane %v534, %v546
    %v548 = vlaneseq
    %v549 = vshrl.u32 %v548, 7
    %v550 = vsub.s32 3, %v549
    %v551 = vrot.slane %v534, %v550
    %v684 = vunpack.c.l.b16 %v406
    %v685 = vunpack.c.h.b16 %v406
    %v686 = vunpack.c.l.b16 %v407
    %v687 = vunpack.c.h.b16 %v407
    %v688 = vunpack.c.l.b16 %v408
    %v689 = vunpack.c.h.b16 %v408
    %v690 = vunpack.c.l.b16 %v409
    %v691 = vunpack.c.h.b16 %v409
    %v692 = vunpack.c.l.b16 %v410
    %v693 = vunpack.c.h.b16 %v410
    %v694 = vunpack.c.l.b16 %v411
    %v695 = vunpack.c.h.b16 %v411
    %v696 = vunpack.c.l.b16 %v412
    %v697 = vunpack.c.h.b16 %v412
    %v698 = vunpack.c.l.b16 %v413
    %v699 = vunpack.c.h.b16 %v413
    %v700 = vunpack.c.l.b16 %v414
    %v701 = vunpack.c.h.b16 %v414
    %v702 = vunpack.c.l.b16 %v415
    %v703 = vunpack.c.h.b16 %v415
    %v704 = vunpack.c.l.b16 %v416
    %v705 = vunpack.c.h.b16 %v416
    %v706 = vunpack.c.l.b16 %v417
    %v707 = vunpack.c.h.b16 %v417
    %v708 = vunpack.c.l.b16 %v418
    %v709 = vunpack.c.h.b16 %v418
    %v710 = vunpack.c.l.b16 %v419
    %v711 = vunpack.c.h.b16 %v419
    %v712 = vunpack.c.l.b16 %v420
    %v713 = vunpack.c.h.b16 %v420
    %v714 = vunpack.c.l.b16 %v421
    %v715 = vunpack.c.h.b16 %v421
    %v716 = vunpack.c.l.b16 %v422
    %v717 = vunpack.c.h.b16 %v422
    %v718 = vunpack.c.l.b16 %v423
    %v719 = vunpack.c.h.b16 %v423
    %v720 = vunpack.c.l.b16 %v424
    %v721 = vunpack.c.h.b16 %v424
    %v722 = vunpack.c.l.b16 %v425
    %v723 = vunpack.c.h.b16 %v425
    %v724 = vunpack.c.l.b16 %v426
    %v725 = vunpack.c.h.b16 %v426
    %v726 = vunpack.c.l.b16 %v427
    %v727 = vunpack.c.h.b16 %v427
    %v728 = vunpack.c.l.b16 %v428
    %v729 = vunpack.c.h.b16 %v428
    %v730 = vunpack.c.l.b16 %v429
    %v731 = vunpack.c.h.b16 %v429
    %v732 = vunpack.c.l.b16 %v430
    %v733 = vunpack.c.h.b16 %v430
    %v734 = vunpack.c.l.b16 %v431
    %v735 = vunpack.c.h.b16 %v431
    %v736 = vunpack.c.l.b16 %v432
    %v737 = vunpack.c.h.b16 %v432
    %v738 = vunpack.c.l.b16 %v433
    %v739 = vunpack.c.h.b16 %v433
    %v740 = vunpack.c.l.b16 %v434
    %v741 = vunpack.c.h.b16 %v434
    %v742 = vunpack.c.l.b16 %v435
    %v743 = vunpack.c.h.b16 %v435
    %v744 = vunpack.c.l.b16 %v436
    %v745 = vunpack.c.h.b16 %v436
    %v746 = vunpack.c.l.b16 %v437
    %v747 = vunpack.c.h.b16 %v437
    %v748 = vunpack.c.l.b16 %v438
    %v749 = vunpack.c.h.b16 %v438
    %v750 = vunpack.c.l.b16 %v439
    %v751 = vunpack.c.h.b16 %v439
    %v752 = vunpack.c.l.b16 %v440
    %v753 = vunpack.c.h.b16 %v440
    %v754 = vunpack.c.l.b16 %v441
    %v755 = vunpack.c.h.b16 %v441
    %v756 = vunpack.c.l.b16 %v442
    %v757 = vunpack.c.h.b16 %v442
    %v758 = vunpack.c.l.b16 %v443
    %v759 = vunpack.c.h.b16 %v443
    %v760 = vunpack.c.l.b16 %v444
    %v761 = vunpack.c.h.b16 %v444
    %v762 = vunpack.c.l.b16 %v445
    %v763 = vunpack.c.h.b16 %v445
    %v764 = vunpack.c.l.b16 %v446
    %v765 = vunpack.c.h.b16 %v446
    %v766 = vunpack.c.l.b16 %v447
    %v767 = vunpack.c.h.b16 %v447
    %v768 = vunpack.c.l.b16 %v448
    %v769 = vunpack.c.h.b16 %v448
    %v770 = vunpack.c.l.b16 %v449
    %v771 = vunpack.c.h.b16 %v449
    %v772 = vunpack.c.l.b16 %v450
    %v773 = vunpack.c.h.b16 %v450
    %v774 = vunpack.c.l.b16 %v451
    %v775 = vunpack.c.h.b16 %v451
    %v776 = vunpack.c.l.b16 %v452
    %v777 = vunpack.c.h.b16 %v452
    %v778 = vunpack.c.l.b16 %v453
    %v779 = vunpack.c.h.b16 %v453
    %v780 = vunpack.c.l.b16 %v454
    %v781 = vunpack.c.h.b16 %v454
    %v782 = vunpack.c.l.b16 %v455
    %v783 = vunpack.c.h.b16 %v455
    %v784 = vunpack.c.l.b16 %v456
    %v785 = vunpack.c.h.b16 %v456
    %v786 = vunpack.c.l.b16 %v457
    %v787 = vunpack.c.h.b16 %v457
    %v788 = vunpack.c.l.b16 %v458
    %v789 = vunpack.c.h.b16 %v458
    %v790 = vunpack.c.l.b16 %v459
    %v791 = vunpack.c.h.b16 %v459
    %v792 = vunpack.c.l.b16 %v460
    %v793 = vunpack.c.h.b16 %v460
    %v794 = vunpack.c.l.b16 %v461
    %v795 = vunpack.c.h.b16 %v461
    %v796 = vunpack.c.l.b16 %v462
    %v797 = vunpack.c.h.b16 %v462
    %v798 = vunpack.c.l.b16 %v463
    %v799 = vunpack.c.h.b16 %v463
    %v800 = vunpack.c.l.b16 %v464
    %v801 = vunpack.c.h.b16 %v464
    %v802 = vunpack.c.l.b16 %v465
    %v803 = vunpack.c.h.b16 %v465
    %v804 = vunpack.c.l.b16 %v466
    %v805 = vunpack.c.h.b16 %v466
    %v806 = vunpack.c.l.b16 %v467
    %v807 = vunpack.c.h.b16 %v467
    %v808 = vunpack.c.l.b16 %v468
    %v809 = vunpack.c.h.b16 %v468
    %v810 = vunpack.c.l.b16 %v469
    %v811 = vunpack.c.h.b16 %v469
    %v812 = vunpack.c.l.b16 %v470
    %v813 = vunpack.c.h.b16 %v470
    %v814 = vunpack.c.l.b16 %v471
    %v815 = vunpack.c.h.b16 %v471
    %v816 = vunpack.c.l.b16 %v472
    %v817 = vunpack.c.h.b16 %v472
    %v818 = vunpack.c.l.b16 %v473
    %v819 = vunpack.c.h.b16 %v473
    %v820 = vunpack.c.l.b16 %v474
    %v821 = vunpack.c.h.b16 %v474
    %v822 = vunpack.c.l.b16 %v475
    %v823 = vunpack.c.h.b16 %v475
    %v824 = vunpack.c.l.b16 %v476
    %v825 = vunpack.c.h.b16 %v476
    %v826 = vunpack.c.l.b16 %v477
    %v827 = vunpack.c.h.b16 %v477
    %v828 = vunpack.c.l.b16 %v478
    %v829 = vunpack.c.h.b16 %v478
    %v830 = vunpack.c.l.b16 %v479
    %v831 = vunpack.c.h.b16 %v479
    %v832 = vunpack.c.l.b16 %v480
    %v833 = vunpack.c.h.b16 %v480
    %v834 = vunpack.c.l.b16 %v481
    %v835 = vunpack.c.h.b16 %v481
    %v836 = vunpack.c.l.b16 %v482
    %v837 = vunpack.c.h.b16 %v482
    %v838 = vunpack.c.l.b16 %v483
    %v839 = vunpack.c.h.b16 %v483
    %v840 = vunpack.c.l.b16 %v484
    %v841 = vunpack.c.h.b16 %v484
    %v842 = vunpack.c.l.b16 %v485
    %v843 = vunpack.c.h.b16 %v485
    %v844 = vunpack.c.l.b16 %v486
    %v845 = vunpack.c.h.b16 %v486
    %v846 = vunpack.c.l.b16 %v487
    %v847 = vunpack.c.h.b16 %v487
    %v848 = vunpack.c.l.b16 %v488
    %v849 = vunpack.c.h.b16 %v488
    %v850 = vunpack.c.l.b16 %v489
    %v851 = vunpack.c.h.b16 %v489
    %v852 = vunpack.c.l.b16 %v490
    %v853 = vunpack.c.h.b16 %v490
    %v854 = vunpack.c.l.b16 %v491
    %v855 = vunpack.c.h.b16 %v491
    %v856 = vunpack.c.l.b16 %v492
    %v857 = vunpack.c.h.b16 %v492
    %v858 = vunpack.c.l.b16 %v493
    %v859 = vunpack.c.h.b16 %v493
    %v860 = vunpack.c.l.b16 %v494
    %v861 = vunpack.c.h.b16 %v494
    %v862 = vunpack.c.l.b16 %v495
    %v863 = vunpack.c.h.b16 %v495
    %v864 = vunpack.c.l.b16 %v496
    %v865 = vunpack.c.h.b16 %v496
    %v866 = vunpack.c.l.b16 %v497
    %v867 = vunpack.c.h.b16 %v497
    %v868 = vunpack.c.l.b16 %v498
    %v869 = vunpack.c.h.b16 %v498
    %v870 = vunpack.c.l.b16 %v499
    %v871 = vunpack.c.h.b16 %v499
    %v872 = vunpack.c.l.b16 %v500
    %v873 = vunpack.c.h.b16 %v500
    %v874 = vunpack.c.l.b16 %v501
    %v875 = vunpack.c.h.b16 %v501
    %v876 = vunpack.c.l.b16 %v502
    %v877 = vunpack.c.h.b16 %v502
    %v878 = vunpack.c.l.b16 %v503
    %v879 = vunpack.c.h.b16 %v503
    %v880 = vunpack.c.l.b16 %v504
    %v881 = vunpack.c.h.b16 %v504
    %v882 = vunpack.c.l.b16 %v505
    %v883 = vunpack.c.h.b16 %v505
    %v884 = vunpack.c.l.b16 %v506
    %v885 = vunpack.c.h.b16 %v506
    %v886 = vunpack.c.l.b16 %v507
    %v887 = vunpack.c.h.b16 %v507
    %v888 = vunpack.c.l.b16 %v508
    %v889 = vunpack.c.h.b16 %v508
    %v890 = vunpack.c.l.b16 %v509
    %v891 = vunpack.c.h.b16 %v509
    %v892 = vunpack.c.l.b16 %v510
    %v893 = vunpack.c.h.b16 %v510
    %v894 = vunpack.c.l.b16 %v511
    %v895 = vunpack.c.h.b16 %v511
    %v896 = vunpack.c.l.b16 %v512
    %v897 = vunpack.c.h.b16 %v512
    %v898 = vunpack.c.l.b16 %v513
    %v899 = vunpack.c.h.b16 %v513
    %v900 = vunpack.c.l.b16 %v514
    %v901 = vunpack.c.h.b16 %v514
    %v902 = vunpack.c.l.b16 %v515
    %v903 = vunpack.c.h.b16 %v515
    %v904 = vunpack.c.l.b16 %v516
    %v905 = vunpack.c.h.b16 %v516
    %v906 = vunpack.c.l.b16 %v517
    %v907 = vunpack.c.h.b16 %v517
    %v908 = vunpack.c.l.b16 %v518
    %v909 = vunpack.c.h.b16 %v518
    %v910 = vunpack.c.l.b16 %v519
    %v911 = vunpack.c.h.b16 %v519
    %v912 = vunpack.c.l.b16 %v520
    %v913 = vunpack.c.h.b16 %v520
    %v914 = vunpack.c.l.b16 %v521
    %v915 = vunpack.c.h.b16 %v521
    %v916 = vunpack.c.l.b16 %v522
    %v917 = vunpack.c.h.b16 %v522
    %v918 = vunpack.c.l.b16 %v523
    %v919 = vunpack.c.h.b16 %v523
    %v920 = vunpack.c.l.b16 %v524
    %v921 = vunpack.c.h.b16 %v524
    %v922 = vunpack.c.l.b16 %v525
    %v923 = vunpack.c.h.b16 %v525
    %v924 = vunpack.c.l.b16 %v526
    %v925 = vunpack.c.h.b16 %v526
    %v926 = vunpack.c.l.b16 %v527
    %v927 = vunpack.c.h.b16 %v527
    %v928 = vunpack.c.l.b16 %v528
    %v929 = vunpack.c.h.b16 %v528
    %v930 = vunpack.c.l.b16 %v529
    %v931 = vunpack.c.h.b16 %v529
    %v932 = vunpack.c.l.b16 %v530
    %v933 = vunpack.c.h.b16 %v530
    %v934 = vunpack.c.l.b16 %v531
    %v935 = vunpack.c.h.b16 %v531
    %v936 = vunpack.c.l.b16 %v532
    %v937 = vunpack.c.h.b16 %v532
    %v938 = vunpack.c.l.b16 %v533
    %v939 = vunpack.c.h.b16 %v533
    %v940 = vpack.c.b16 %v688, %v684
    %v941 = vpack.c.b16 %v689, %v685
    %v942 = vpack.c.b16 %v690, %v686
    %v943 = vpack.c.b16 %v691, %v687
    %v944 = vpack.c.b16 %v696, %v692
    %v945 = vpack.c.b16 %v697, %v693
    %v946 = vpack.c.b16 %v698, %v694
    %v947 = vpack.c.b16 %v699, %v695
    %v948 = vpack.c.b16 %v704, %v700
    %v949 = vpack.c.b16 %v705, %v701
    %v950 = vpack.c.b16 %v706, %v702
    %v951 = vpack.c.b16 %v707, %v703
    %v952 = vpack.c.b16 %v712, %v708
    %v953 = vpack.c.b16 %v713, %v709
    %v954 = vpack.c.b16 %v714, %v710
    %v955 = vpack.c.b16 %v715, %v711
    %v956 = vpack.c.b16 %v720, %v716
    %v957 = vpack.c.b16 %v721, %v717
    %v958 = vpack.c.b16 %v722, %v718
    %v959 = vpack.c.b16 %v723, %v719
    %v960 = vpack.c.b16 %v728, %v724
    %v961 = vpack.c.b16 %v729, %v725
    %v962 = vpack.c.b16 %v730, %v726
    %v963 = vpack.c.b16 %v731, %v727
    %v964 = vpack.c.b16 %v736, %v732
    %v965 = vpack.c.b16 %v737, %v733
    %v966 = vpack.c.b16 %v738, %v734
    %v967 = vpack.c.b16 %v739, %v735
    %v968 = vpack.c.b16 %v744, %v740
    %v969 = vpack.c.b16 %v745, %v741
    %v970 = vpack.c.b16 %v746, %v742
    %v971 = vpack.c.b16 %v747, %v743
    %v972 = vpack.c.b16 %v752, %v748
    %v973 = vpack.c.b16 %v753, %v749
    %v974 = vpack.c.b16 %v754, %v750
    %v975 = vpack.c.b16 %v755, %v751
    %v976 = vpack.c.b16 %v760, %v756
    %v977 = vpack.c.b16 %v761, %v757
    %v978 = vpack.c.b16 %v762, %v758
    %v979 = vpack.c.b16 %v763, %v759
    %v980 = vpack.c.b16 %v768, %v764
    %v981 = vpack.c.b16 %v769, %v765
    %v982 = vpack.c.b16 %v770, %v766
    %v983 = vpack.c.b16 %v771, %v767
    %v984 = vpack.c.b16 %v776, %v772
    %v985 = vpack.c.b16 %v777, %v773
    %v986 = vpack.c.b16 %v778, %v774
    %v987 = vpack.c.b16 %v779, %v775
    %v988 = vpack.c.b16 %v784, %v780
    %v989 = vpack.c.b16 %v785, %v781
    %v990 = vpack.c.b16 %v786, %v782
    %v991 = vpack.c.b16 %v787, %v783
    %v992 = vpack.c.b16 %v792, %v788
    %v993 = vpack.c.b16 %v793, %v789
    %v994 = vpack.c.b16 %v794, %v790
    %v995 = vpack.c.b16 %v795, %v791
    %v996 = vpack.c.b16 %v800, %v796
    %v997 = vpack.c.b16 %v801, %v797
    %v998 = vpack.c.b16 %v802, %v798
    %v999 = vpack.c.b16 %v803, %v799
    %v1000 = vpack.c.b16 %v808, %v804
    %v1001 = vpack.c.b16 %v809, %v805
    %v1002 = vpack.c.b16 %v810, %v806
    %v1003 = vpack.c.b16 %v811, %v807
    %v1004 = vpack.c.b16 %v816, %v812
    %v1005 = vpack.c.b16 %v817, %v813
    %v1006 = vpack.c.b16 %v818, %v814
    %v1007 = vpack.c.b16 %v819, %v815
    %v1008 = vpack.c.b16 %v824, %v820
    %v1009 = vpack.c.b16 %v825, %v821
    %v1010 = vpack.c.b16 %v826, %v822
    %v1011 = vpack.c.b16 %v827, %v823
    %v1012 = vpack.c.b16 %v832, %v828
    %v1013 = vpack.c.b16 %v833, %v829
    %v1014 = vpack.c.b16 %v834, %v830
    %v1015 = vpack.c.b16 %v835, %v831
    %v1016 = vpack.c.b16 %v840, %v836
    %v1017 = vpack.c.b16 %v841, %v837
    %v1018 = vpack.c.b16 %v842, %v838
    %v1019 = vpack.c.b16 %v843, %v839
    %v1020 = vpack.c.b16 %v848, %v844
    %v1021 = vpack.c.b16 %v849, %v845
    %v1022 = vpack.c.b16 %v850, %v846
    %v1023 = vpack.c.b16 %v851, %v847
    %v1024 = vpack.c.b16 %v856, %v852
    %v1025 = vpack.c.b16 %v857, %v853
    %v1026 = vpack.c.b16 %v858, %v854
    %v1027 = vpack.c.b16 %v859, %v855
    %v1028 = vpack.c.b16 %v864, %v860
    %v1029 = vpack.c.b16 %v865, %v861
    %v1030 = vpack.c.b16 %v866, %v862
    %v1031 = vpack.c.b16 %v867, %v863
    %v1032 = vpack.c.b16 %v872, %v868
    %v1033 = vpack.c.b16 %v873, %v869
    %v1034 = vpack.c.b16 %v874, %v870
    %v1035 = vpack.c.b16 %v875, %v871
    %v1036 = vpack.c.b16 %v880, %v876
    %v1037 = vpack.c.b16 %v881, %v877
    %v1038 = vpack.c.b16 %v882, %v878
    %v1039 = vpack.c.b16 %v883, %v879
    %v1040 = vpack.c.b16 %v888, %v884
    %v1041 = vpack.c.b16 %v889, %v885
    %v1042 = vpack.c.b16 %v890, %v886
    %v1043 = vpack.c.b16 %v891, %v887
    %v1044 = vpack.c.b16 %v896, %v892
    %v1045 = vpack.c.b16 %v897, %v893
    %v1046 = vpack.c.b16 %v898, %v894
    %v1047 = vpack.c.b16 %v899, %v895
    %v1048 = vpack.c.b16 %v904, %v900
    %v1049 = vpack.c.b16 %v905, %v901
    %v1050 = vpack.c.b16 %v906, %v902
    %v1051 = vpack.c.b16 %v907, %v903
    %v1052 = vpack.c.b16 %v912, %v908
    %v1053 = vpack.c.b16 %v913, %v909
    %v1054 = vpack.c.b16 %v914, %v910
    %v1055 = vpack.c.b16 %v915, %v911
    %v1056 = vpack.c.b16 %v920, %v916
    %v1057 = vpack.c.b16 %v921, %v917
    %v1058 = vpack.c.b16 %v922, %v918
    %v1059 = vpack.c.b16 %v923, %v919
    %v1060 = vpack.c.b16 %v928, %v924
    %v1061 = vpack.c.b16 %v929, %v925
    %v1062 = vpack.c.b16 %v930, %v926
    %v1063 = vpack.c.b16 %v931, %v927
    %v1064 = vpack.c.b16 %v936, %v932
    %v1065 = vpack.c.b16 %v937, %v933
    %v1066 = vpack.c.b16 %v938, %v934
    %v1067 = vpack.c.b16 %v939, %v935
    %1196 = vmatprep.subr.bf16.mxu0 %v941
    %1197 = vmatpush1.bf16.msra.mxu0 %v940
    %1198 = vmatprep.subr.bf16.mxu0 %v945
    %1199 = vmatpush1.bf16.msra.mxu0 %v944
    %1200 = vmatprep.subr.bf16.mxu0 %v949
    %1201 = vmatpush1.bf16.msra.mxu0 %v948
    %1202 = vmatprep.subr.bf16.mxu0 %v953
    %1203 = vmatpush1.bf16.msra.mxu0 %v952
    %1204 = vmatprep.subr.bf16.mxu0 %v957
    %1205 = vmatpush1.bf16.msra.mxu0 %v956
    %1206 = vmatprep.subr.bf16.mxu0 %v961
    %1207 = vmatpush1.bf16.msra.mxu0 %v960
    %1208 = vmatprep.subr.bf16.mxu0 %v965
    %1209 = vmatpush1.bf16.msra.mxu0 %v964
    %1210 = vmatprep.subr.bf16.mxu0 %v969
    %1211 = vmatpush1.bf16.msra.mxu0 %v968
    %1212 = vmatprep.subr.bf16.mxu0 %v973
    %1213 = vmatpush1.bf16.msra.mxu0 %v972
    %1214 = vmatprep.subr.bf16.mxu0 %v977
    %1215 = vmatpush1.bf16.msra.mxu0 %v976
    %1216 = vmatprep.subr.bf16.mxu0 %v981
    %1217 = vmatpush1.bf16.msra.mxu0 %v980
    %1218 = vmatprep.subr.bf16.mxu0 %v985
    %1219 = vmatpush1.bf16.msra.mxu0 %v984
    %1220 = vmatprep.subr.bf16.mxu0 %v989
    %1221 = vmatpush1.bf16.msra.mxu0 %v988
    %1222 = vmatprep.subr.bf16.mxu0 %v993
    %1223 = vmatpush1.bf16.msra.mxu0 %v992
    %1224 = vmatprep.subr.bf16.mxu0 %v997
    %1225 = vmatpush1.bf16.msra.mxu0 %v996
    %1226 = vmatprep.subr.bf16.mxu0 %v1001
    %1227 = vmatpush1.bf16.msra.mxu0 %v1000
    %1228 = vmatprep.mubr.bf16.mxu0 %v403
    %1229 = vmatmul.mubr.bf16.gmra.mrb[0].mxu0 %v402
    %v1230 = vpop.f32.mrb[0].mxu0
    %v1231 = vadd.f32 %v539, %v1230
    %v1232 = vpop.f32.mrb[0].mxu0
    %v1233 = vadd.f32 %v543, %v1232
    %v1234 = vpop.f32.mrb[0].mxu0
    %v1235 = vpop.f32.mrb[0].mxu0
    %1236 = vdwg.mxu0
    %1237 = vmatprep.subr.bf16.mxu0 %v1005
    %1238 = vmatpush1.bf16.msra.mxu0 %v1004
    %1239 = vmatprep.subr.bf16.mxu0 %v1009
    %1240 = vmatpush1.bf16.msra.mxu0 %v1008
    %1241 = vmatprep.subr.bf16.mxu0 %v1013
    %1242 = vmatpush1.bf16.msra.mxu0 %v1012
    %1243 = vmatprep.subr.bf16.mxu0 %v1017
    %1244 = vmatpush1.bf16.msra.mxu0 %v1016
    %1245 = vmatprep.subr.bf16.mxu0 %v1021
    %1246 = vmatpush1.bf16.msra.mxu0 %v1020
    %1247 = vmatprep.subr.bf16.mxu0 %v1025
    %1248 = vmatpush1.bf16.msra.mxu0 %v1024
    %1249 = vmatprep.subr.bf16.mxu0 %v1029
    %1250 = vmatpush1.bf16.msra.mxu0 %v1028
    %1251 = vmatprep.subr.bf16.mxu0 %v1033
    %1252 = vmatpush1.bf16.msra.mxu0 %v1032
    %1253 = vmatprep.subr.bf16.mxu0 %v1037
    %1254 = vmatpush1.bf16.msra.mxu0 %v1036
    %1255 = vmatprep.subr.bf16.mxu0 %v1041
    %1256 = vmatpush1.bf16.msra.mxu0 %v1040
    %1257 = vmatprep.subr.bf16.mxu0 %v1045
    %1258 = vmatpush1.bf16.msra.mxu0 %v1044
    %1259 = vmatprep.subr.bf16.mxu0 %v1049
    %1260 = vmatpush1.bf16.msra.mxu0 %v1048
    %1261 = vmatprep.subr.bf16.mxu0 %v1053
    %1262 = vmatpush1.bf16.msra.mxu0 %v1052
    %1263 = vmatprep.subr.bf16.mxu0 %v1057
    %1264 = vmatpush1.bf16.msra.mxu0 %v1056
    %1265 = vmatprep.subr.bf16.mxu0 %v1061
    %1266 = vmatpush1.bf16.msra.mxu0 %v1060
    %1267 = vmatprep.subr.bf16.mxu0 %v1065
    %1268 = vmatpush1.bf16.msra.mxu0 %v1064
    %1269 = vmatprep.mubr.bf16.mxu0 %v405
    %1270 = vmatmul.mubr.bf16.gmra.mrb[0].mxu0 %v404
    %v1271 = vpop.f32.mrb[0].mxu0
    %v1272 = vadd.f32 %v1231, %v1271
    %v1273 = vpop.f32.mrb[0].mxu0
    %v1274 = vadd.f32 %v1233, %v1273
    %v1275 = vpop.f32.mrb[0].mxu0
    %v1276 = vpop.f32.mrb[0].mxu0
    %1277 = vdwg.mxu0
    %1278 = vmatprep.subr.bf16.mxu0 %v943
    %1279 = vmatpush1.bf16.msra.mxu0 %v942
    %1280 = vmatprep.subr.bf16.mxu0 %v947
    %1281 = vmatpush1.bf16.msra.mxu0 %v946
    %1282 = vmatprep.subr.bf16.mxu0 %v951
    %1283 = vmatpush1.bf16.msra.mxu0 %v950
    %1284 = vmatprep.subr.bf16.mxu0 %v955
    %1285 = vmatpush1.bf16.msra.mxu0 %v954
    %1286 = vmatprep.subr.bf16.mxu0 %v959
    %1287 = vmatpush1.bf16.msra.mxu0 %v958
    %1288 = vmatprep.subr.bf16.mxu0 %v963
    %1289 = vmatpush1.bf16.msra.mxu0 %v962
    %1290 = vmatprep.subr.bf16.mxu0 %v967
    %1291 = vmatpush1.bf16.msra.mxu0 %v966
    %1292 = vmatprep.subr.bf16.mxu0 %v971
    %1293 = vmatpush1.bf16.msra.mxu0 %v970
    %1294 = vmatprep.subr.bf16.mxu0 %v975
    %1295 = vmatpush1.bf16.msra.mxu0 %v974
    %1296 = vmatprep.subr.bf16.mxu0 %v979
    %1297 = vmatpush1.bf16.msra.mxu0 %v978
    %1298 = vmatprep.subr.bf16.mxu0 %v983
    %1299 = vmatpush1.bf16.msra.mxu0 %v982
    %1300 = vmatprep.subr.bf16.mxu0 %v987
    %1301 = vmatpush1.bf16.msra.mxu0 %v986
    %1302 = vmatprep.subr.bf16.mxu0 %v991
    %1303 = vmatpush1.bf16.msra.mxu0 %v990
    %1304 = vmatprep.subr.bf16.mxu0 %v995
    %1305 = vmatpush1.bf16.msra.mxu0 %v994
    %1306 = vmatprep.subr.bf16.mxu0 %v999
    %1307 = vmatpush1.bf16.msra.mxu0 %v998
    %1308 = vmatprep.subr.bf16.mxu0 %v1003
    %1309 = vmatpush1.bf16.msra.mxu0 %v1002
    %1310 = vmatprep.mubr.bf16.mxu0 %v403
    %1311 = vmatmul.mubr.bf16.gmra.mrb[0].mxu0 %v402
    %v1312 = vpop.f32.mrb[0].mxu0
    %v1313 = vadd.f32 %v547, %v1312
    %v1314 = vpop.f32.mrb[0].mxu0
    %v1315 = vadd.f32 %v551, %v1314
    %v1316 = vpop.f32.mrb[0].mxu0
    %v1317 = vpop.f32.mrb[0].mxu0
    %1318 = vdwg.mxu0
    %1319 = vmatprep.subr.bf16.mxu0 %v1007
    %1320 = vmatpush1.bf16.msra.mxu0 %v1006
    %1321 = vmatprep.subr.bf16.mxu0 %v1011
    %1322 = vmatpush1.bf16.msra.mxu0 %v1010
    %1323 = vmatprep.subr.bf16.mxu0 %v1015
    %1324 = vmatpush1.bf16.msra.mxu0 %v1014
    %1325 = vmatprep.subr.bf16.mxu0 %v1019
    %1326 = vmatpush1.bf16.msra.mxu0 %v1018
    %1327 = vmatprep.subr.bf16.mxu0 %v1023
    %1328 = vmatpush1.bf16.msra.mxu0 %v1022
    %1329 = vmatprep.subr.bf16.mxu0 %v1027
    %1330 = vmatpush1.bf16.msra.mxu0 %v1026
    %1331 = vmatprep.subr.bf16.mxu0 %v1031
    %1332 = vmatpush1.bf16.msra.mxu0 %v1030
    %1333 = vmatprep.subr.bf16.mxu0 %v1035
    %1334 = vmatpush1.bf16.msra.mxu0 %v1034
    %1335 = vmatprep.subr.bf16.mxu0 %v1039
    %1336 = vmatpush1.bf16.msra.mxu0 %v1038
    %1337 = vmatprep.subr.bf16.mxu0 %v1043
    %1338 = vmatpush1.bf16.msra.mxu0 %v1042
    %1339 = vmatprep.subr.bf16.mxu0 %v1047
    %1340 = vmatpush1.bf16.msra.mxu0 %v1046
    %1341 = vmatprep.subr.bf16.mxu0 %v1051
    %1342 = vmatpush1.bf16.msra.mxu0 %v1050
    %1343 = vmatprep.subr.bf16.mxu0 %v1055
    %1344 = vmatpush1.bf16.msra.mxu0 %v1054
    %1345 = vmatprep.subr.bf16.mxu0 %v1059
    %1346 = vmatpush1.bf16.msra.mxu0 %v1058
    %1347 = vmatprep.subr.bf16.mxu0 %v1063
    %1348 = vmatpush1.bf16.msra.mxu0 %v1062
    %1349 = vmatprep.subr.bf16.mxu0 %v1067
    %1350 = vmatpush1.bf16.msra.mxu0 %v1066
    %1351 = vmatprep.mubr.bf16.mxu0 %v405
    %1352 = vmatmul.mubr.bf16.gmra.mrb[0].mxu0 %v404
    %v1353 = vpop.f32.mrb[0].mxu0
    %v1354 = vadd.f32 %v1313, %v1353
    %v1355 = vpop.f32.mrb[0].mxu0
    %v1356 = vadd.f32 %v1315, %v1355
    %v1357 = vpop.f32.mrb[0].mxu0
    %v1358 = vpop.f32.mrb[0].mxu0
    %1359 = vdwg.mxu0
    %v1360 = vmax.f32 %v1272, 0.0
    %v1361 = vmax.f32 %v1274, 0.0
    %v1362 = vmax.f32 %v1354, 0.0
    %v1363 = vmax.f32 %v1356, 0.0
    %v1364 = vpack.c.bf16 %v1360, %v1360
    %v1365 = vpack.c.bf16 %v1361, %v1361
    %v1366 = vpack.c.bf16 %v1362, %v1362
    %v1367 = vpack.c.bf16 %v1363, %v1363
    %v1368 = vld [vmem:[#allocation8] sm:$0xff]
    %v1369 = vld [vmem:[#allocation8 + $0x8] sm:$0xff]
    %v1370 = vld [vmem:[#allocation8 + $0x10] sm:$0xff]
    %v1371 = vld [vmem:[#allocation8 + $0x18] sm:$0xff]
    %v1372 = vld [vmem:[#allocation8 + $0x20] sm:$0xff]
    %v1373 = vld [vmem:[#allocation8 + $0x28] sm:$0xff]
    %v1374 = vld [vmem:[#allocation8 + $0x30] sm:$0xff]
    %v1375 = vld [vmem:[#allocation8 + $0x38] sm:$0xff]
    %v1376 = vld [vmem:[#allocation8 + $0x40] sm:$0xff]
    %v1377 = vld [vmem:[#allocation8 + $0x48] sm:$0xff]
    %v1378 = vld [vmem:[#allocation8 + $0x50] sm:$0xff]
    %v1379 = vld [vmem:[#allocation8 + $0x58] sm:$0xff]
    %v1380 = vld [vmem:[#allocation8 + $0x60] sm:$0xff]
    %v1381 = vld [vmem:[#allocation8 + $0x68] sm:$0xff]
    %v1382 = vld [vmem:[#allocation8 + $0x70] sm:$0xff]
    %v1383 = vld [vmem:[#allocation8 + $0x78] sm:$0xff]
    %v1384 = vld [vmem:[#allocation8 + $0x80] sm:$0xff]
    %v1385 = vld [vmem:[#allocation8 + $0x88] sm:$0xff]
    %v1386 = vld [vmem:[#allocation8 + $0x90] sm:$0xff]
    %v1387 = vld [vmem:[#allocation8 + $0x98] sm:$0xff]
    %v1388 = vld [vmem:[#allocation8 + $0xa0] sm:$0xff]
    %v1389 = vld [vmem:[#allocation8 + $0xa8] sm:$0xff]
    %v1390 = vld [vmem:[#allocation8 + $0xb0] sm:$0xff]
    %v1391 = vld [vmem:[#allocation8 + $0xb8] sm:$0xff]
    %v1392 = vld [vmem:[#allocation8 + $0xc0] sm:$0xff]
    %v1393 = vld [vmem:[#allocation8 + $0xc8] sm:$0xff]
    %v1394 = vld [vmem:[#allocation8 + $0xd0] sm:$0xff]
    %v1395 = vld [vmem:[#allocation8 + $0xd8] sm:$0xff]
    %v1396 = vld [vmem:[#allocation8 + $0xe0] sm:$0xff]
    %v1397 = vld [vmem:[#allocation8 + $0xe8] sm:$0xff]
    %v1398 = vld [vmem:[#allocation8 + $0xf0] sm:$0xff]
    %v1399 = vld [vmem:[#allocation8 + $0xf8] sm:$0xff]
    %v1400 = vld [vmem:[#allocation8 + $0x100] sm:$0xff]
    %v1401 = vld [vmem:[#allocation8 + $0x108] sm:$0xff]
    %v1402 = vld [vmem:[#allocation8 + $0x110] sm:$0xff]
    %v1403 = vld [vmem:[#allocation8 + $0x118] sm:$0xff]
    %v1404 = vld [vmem:[#allocation8 + $0x120] sm:$0xff]
    %v1405 = vld [vmem:[#allocation8 + $0x128] sm:$0xff]
    %v1406 = vld [vmem:[#allocation8 + $0x130] sm:$0xff]
    %v1407 = vld [vmem:[#allocation8 + $0x138] sm:$0xff]
    %v1408 = vld [vmem:[#allocation8 + $0x140] sm:$0xff]
    %v1409 = vld [vmem:[#allocation8 + $0x148] sm:$0xff]
    %v1410 = vld [vmem:[#allocation8 + $0x150] sm:$0xff]
    %v1411 = vld [vmem:[#allocation8 + $0x158] sm:$0xff]
    %v1412 = vld [vmem:[#allocation8 + $0x160] sm:$0xff]
    %v1413 = vld [vmem:[#allocation8 + $0x168] sm:$0xff]
    %v1414 = vld [vmem:[#allocation8 + $0x170] sm:$0xff]
    %v1415 = vld [vmem:[#allocation8 + $0x178] sm:$0xff]
    %v1416 = vld [vmem:[#allocation8 + $0x180] sm:$0xff]
    %v1417 = vld [vmem:[#allocation8 + $0x188] sm:$0xff]
    %v1418 = vld [vmem:[#allocation8 + $0x190] sm:$0xff]
    %v1419 = vld [vmem:[#allocation8 + $0x198] sm:$0xff]
    %v1420 = vld [vmem:[#allocation8 + $0x1a0] sm:$0xff]
    %v1421 = vld [vmem:[#allocation8 + $0x1a8] sm:$0xff]
    %v1422 = vld [vmem:[#allocation8 + $0x1b0] sm:$0xff]
    %v1423 = vld [vmem:[#allocation8 + $0x1b8] sm:$0xff]
    %v1424 = vld [vmem:[#allocation8 + $0x1c0] sm:$0xff]
    %v1425 = vld [vmem:[#allocation8 + $0x1c8] sm:$0xff]
    %v1426 = vld [vmem:[#allocation8 + $0x1d0] sm:$0xff]
    %v1427 = vld [vmem:[#allocation8 + $0x1d8] sm:$0xff]
    %v1428 = vld [vmem:[#allocation8 + $0x1e0] sm:$0xff]
    %v1429 = vld [vmem:[#allocation8 + $0x1e8] sm:$0xff]
    %v1430 = vld [vmem:[#allocation8 + $0x1f0] sm:$0xff]
    %v1431 = vld [vmem:[#allocation8 + $0x1f8] sm:$0xff]
    %v1432 = vld [vmem:[#allocation8 + $0x200] sm:$0xff]
    %v1433 = vld [vmem:[#allocation8 + $0x208] sm:$0xff]
    %v1434 = vld [vmem:[#allocation8 + $0x210] sm:$0xff]
    %v1435 = vld [vmem:[#allocation8 + $0x218] sm:$0xff]
    %v1436 = vld [vmem:[#allocation8 + $0x220] sm:$0xff]
    %v1437 = vld [vmem:[#allocation8 + $0x228] sm:$0xff]
    %v1438 = vld [vmem:[#allocation8 + $0x230] sm:$0xff]
    %v1439 = vld [vmem:[#allocation8 + $0x238] sm:$0xff]
    %v1440 = vld [vmem:[#allocation8 + $0x240] sm:$0xff]
    %v1441 = vld [vmem:[#allocation8 + $0x248] sm:$0xff]
    %v1442 = vld [vmem:[#allocation8 + $0x250] sm:$0xff]
    %v1443 = vld [vmem:[#allocation8 + $0x258] sm:$0xff]
    %v1444 = vld [vmem:[#allocation8 + $0x260] sm:$0xff]
    %v1445 = vld [vmem:[#allocation8 + $0x268] sm:$0xff]
    %v1446 = vld [vmem:[#allocation8 + $0x270] sm:$0xff]
    %v1447 = vld [vmem:[#allocation8 + $0x278] sm:$0xff]
    %v1448 = vld [vmem:[#allocation8 + $0x280] sm:$0xff]
    %v1449 = vld [vmem:[#allocation8 + $0x288] sm:$0xff]
    %v1450 = vld [vmem:[#allocation8 + $0x290] sm:$0xff]
    %v1451 = vld [vmem:[#allocation8 + $0x298] sm:$0xff]
    %v1452 = vld [vmem:[#allocation8 + $0x2a0] sm:$0xff]
    %v1453 = vld [vmem:[#allocation8 + $0x2a8] sm:$0xff]
    %v1454 = vld [vmem:[#allocation8 + $0x2b0] sm:$0xff]
    %v1455 = vld [vmem:[#allocation8 + $0x2b8] sm:$0xff]
    %v1456 = vld [vmem:[#allocation8 + $0x2c0] sm:$0xff]
    %v1457 = vld [vmem:[#allocation8 + $0x2c8] sm:$0xff]
    %v1458 = vld [vmem:[#allocation8 + $0x2d0] sm:$0xff]
    %v1459 = vld [vmem:[#allocation8 + $0x2d8] sm:$0xff]
    %v1460 = vld [vmem:[#allocation8 + $0x2e0] sm:$0xff]
    %v1461 = vld [vmem:[#allocation8 + $0x2e8] sm:$0xff]
    %v1462 = vld [vmem:[#allocation8 + $0x2f0] sm:$0xff]
    %v1463 = vld [vmem:[#allocation8 + $0x2f8] sm:$0xff]
    %v1464 = vld [vmem:[#allocation8 + $0x300] sm:$0xff]
    %v1465 = vld [vmem:[#allocation8 + $0x308] sm:$0xff]
    %v1466 = vld [vmem:[#allocation8 + $0x310] sm:$0xff]
    %v1467 = vld [vmem:[#allocation8 + $0x318] sm:$0xff]
    %v1468 = vld [vmem:[#allocation8 + $0x320] sm:$0xff]
    %v1469 = vld [vmem:[#allocation8 + $0x328] sm:$0xff]
    %v1470 = vld [vmem:[#allocation8 + $0x330] sm:$0xff]
    %v1471 = vld [vmem:[#allocation8 + $0x338] sm:$0xff]
    %v1472 = vld [vmem:[#allocation8 + $0x340] sm:$0xff]
    %v1473 = vld [vmem:[#allocation8 + $0x348] sm:$0xff]
    %v1474 = vld [vmem:[#allocation8 + $0x350] sm:$0xff]
    %v1475 = vld [vmem:[#allocation8 + $0x358] sm:$0xff]
    %v1476 = vld [vmem:[#allocation8 + $0x360] sm:$0xff]
    %v1477 = vld [vmem:[#allocation8 + $0x368] sm:$0xff]
    %v1478 = vld [vmem:[#allocation8 + $0x370] sm:$0xff]
    %v1479 = vld [vmem:[#allocation8 + $0x378] sm:$0xff]
    %v1480 = vld [vmem:[#allocation8 + $0x380] sm:$0xff]
    %v1481 = vld [vmem:[#allocation8 + $0x388] sm:$0xff]
    %v1482 = vld [vmem:[#allocation8 + $0x390] sm:$0xff]
    %v1483 = vld [vmem:[#allocation8 + $0x398] sm:$0xff]
    %v1484 = vld [vmem:[#allocation8 + $0x3a0] sm:$0xff]
    %v1485 = vld [vmem:[#allocation8 + $0x3a8] sm:$0xff]
    %v1486 = vld [vmem:[#allocation8 + $0x3b0] sm:$0xff]
    %v1487 = vld [vmem:[#allocation8 + $0x3b8] sm:$0xff]
    %v1488 = vld [vmem:[#allocation8 + $0x3c0] sm:$0xff]
    %v1489 = vld [vmem:[#allocation8 + $0x3c8] sm:$0xff]
    %v1490 = vld [vmem:[#allocation8 + $0x3d0] sm:$0xff]
    %v1491 = vld [vmem:[#allocation8 + $0x3d8] sm:$0xff]
    %v1492 = vld [vmem:[#allocation8 + $0x3e0] sm:$0xff]
    %v1493 = vld [vmem:[#allocation8 + $0x3e8] sm:$0xff]
    %v1494 = vld [vmem:[#allocation8 + $0x3f0] sm:$0xff]
    %v1495 = vld [vmem:[#allocation8 + $0x3f8] sm:$0xff]
    %v1496 = vld [vmem:[%s6] sm:$0xf]
    %v1498 = vlaneseq
    %v1499 = vshrl.u32 %v1498, 7
    %v1500 = vsub.s32 0, %v1499
    %v1501 = vrot.slane %v1496, %v1500
    %v1502 = vlaneseq
    %v1503 = vshrl.u32 %v1502, 7
    %v1504 = vsub.s32 1, %v1503
    %v1505 = vrot.slane %v1496, %v1504
    %v1506 = vlaneseq
    %v1507 = vshrl.u32 %v1506, 7
    %v1508 = vsub.s32 2, %v1507
    %v1509 = vrot.slane %v1496, %v1508
    %v1510 = vlaneseq
    %v1511 = vshrl.u32 %v1510, 7
    %v1512 = vsub.s32 3, %v1511
    %v1513 = vrot.slane %v1496, %v1512
    %v1646 = vunpack.c.l.b16 %v1368
    %v1647 = vunpack.c.h.b16 %v1368
    %v1648 = vunpack.c.l.b16 %v1369
    %v1649 = vunpack.c.h.b16 %v1369
    %v1650 = vunpack.c.l.b16 %v1370
    %v1651 = vunpack.c.h.b16 %v1370
    %v1652 = vunpack.c.l.b16 %v1371
    %v1653 = vunpack.c.h.b16 %v1371
    %v1654 = vunpack.c.l.b16 %v1372
    %v1655 = vunpack.c.h.b16 %v1372
    %v1656 = vunpack.c.l.b16 %v1373
    %v1657 = vunpack.c.h.b16 %v1373
    %v1658 = vunpack.c.l.b16 %v1374
    %v1659 = vunpack.c.h.b16 %v1374
    %v1660 = vunpack.c.l.b16 %v1375
    %v1661 = vunpack.c.h.b16 %v1375
    %v1662 = vunpack.c.l.b16 %v1376
    %v1663 = vunpack.c.h.b16 %v1376
    %v1664 = vunpack.c.l.b16 %v1377
    %v1665 = vunpack.c.h.b16 %v1377
    %v1666 = vunpack.c.l.b16 %v1378
    %v1667 = vunpack.c.h.b16 %v1378
    %v1668 = vunpack.c.l.b16 %v1379
    %v1669 = vunpack.c.h.b16 %v1379
    %v1670 = vunpack.c.l.b16 %v1380
    %v1671 = vunpack.c.h.b16 %v1380
    %v1672 = vunpack.c.l.b16 %v1381
    %v1673 = vunpack.c.h.b16 %v1381
    %v1674 = vunpack.c.l.b16 %v1382
    %v1675 = vunpack.c.h.b16 %v1382
    %v1676 = vunpack.c.l.b16 %v1383
    %v1677 = vunpack.c.h.b16 %v1383
    %v1678 = vunpack.c.l.b16 %v1384
    %v1679 = vunpack.c.h.b16 %v1384
    %v1680 = vunpack.c.l.b16 %v1385
    %v1681 = vunpack.c.h.b16 %v1385
    %v1682 = vunpack.c.l.b16 %v1386
    %v1683 = vunpack.c.h.b16 %v1386
    %v1684 = vunpack.c.l.b16 %v1387
    %v1685 = vunpack.c.h.b16 %v1387
    %v1686 = vunpack.c.l.b16 %v1388
    %v1687 = vunpack.c.h.b16 %v1388
    %v1688 = vunpack.c.l.b16 %v1389
    %v1689 = vunpack.c.h.b16 %v1389
    %v1690 = vunpack.c.l.b16 %v1390
    %v1691 = vunpack.c.h.b16 %v1390
    %v1692 = vunpack.c.l.b16 %v1391
    %v1693 = vunpack.c.h.b16 %v1391
    %v1694 = vunpack.c.l.b16 %v1392
    %v1695 = vunpack.c.h.b16 %v1392
    %v1696 = vunpack.c.l.b16 %v1393
    %v1697 = vunpack.c.h.b16 %v1393
    %v1698 = vunpack.c.l.b16 %v1394
    %v1699 = vunpack.c.h.b16 %v1394
    %v1700 = vunpack.c.l.b16 %v1395
    %v1701 = vunpack.c.h.b16 %v1395
    %v1702 = vunpack.c.l.b16 %v1396
    %v1703 = vunpack.c.h.b16 %v1396
    %v1704 = vunpack.c.l.b16 %v1397
    %v1705 = vunpack.c.h.b16 %v1397
    %v1706 = vunpack.c.l.b16 %v1398
    %v1707 = vunpack.c.h.b16 %v1398
    %v1708 = vunpack.c.l.b16 %v1399
    %v1709 = vunpack.c.h.b16 %v1399
    %v1710 = vunpack.c.l.b16 %v1400
    %v1711 = vunpack.c.h.b16 %v1400
    %v1712 = vunpack.c.l.b16 %v1401
    %v1713 = vunpack.c.h.b16 %v1401
    %v1714 = vunpack.c.l.b16 %v1402
    %v1715 = vunpack.c.h.b16 %v1402
    %v1716 = vunpack.c.l.b16 %v1403
    %v1717 = vunpack.c.h.b16 %v1403
    %v1718 = vunpack.c.l.b16 %v1404
    %v1719 = vunpack.c.h.b16 %v1404
    %v1720 = vunpack.c.l.b16 %v1405
    %v1721 = vunpack.c.h.b16 %v1405
    %v1722 = vunpack.c.l.b16 %v1406
    %v1723 = vunpack.c.h.b16 %v1406
    %v1724 = vunpack.c.l.b16 %v1407
    %v1725 = vunpack.c.h.b16 %v1407
    %v1726 = vunpack.c.l.b16 %v1408
    %v1727 = vunpack.c.h.b16 %v1408
    %v1728 = vunpack.c.l.b16 %v1409
    %v1729 = vunpack.c.h.b16 %v1409
    %v1730 = vunpack.c.l.b16 %v1410
    %v1731 = vunpack.c.h.b16 %v1410
    %v1732 = vunpack.c.l.b16 %v1411
    %v1733 = vunpack.c.h.b16 %v1411
    %v1734 = vunpack.c.l.b16 %v1412
    %v1735 = vunpack.c.h.b16 %v1412
    %v1736 = vunpack.c.l.b16 %v1413
    %v1737 = vunpack.c.h.b16 %v1413
    %v1738 = vunpack.c.l.b16 %v1414
    %v1739 = vunpack.c.h.b16 %v1414
    %v1740 = vunpack.c.l.b16 %v1415
    %v1741 = vunpack.c.h.b16 %v1415
    %v1742 = vunpack.c.l.b16 %v1416
    %v1743 = vunpack.c.h.b16 %v1416
    %v1744 = vunpack.c.l.b16 %v1417
    %v1745 = vunpack.c.h.b16 %v1417
    %v1746 = vunpack.c.l.b16 %v1418
    %v1747 = vunpack.c.h.b16 %v1418
    %v1748 = vunpack.c.l.b16 %v1419
    %v1749 = vunpack.c.h.b16 %v1419
    %v1750 = vunpack.c.l.b16 %v1420
    %v1751 = vunpack.c.h.b16 %v1420
    %v1752 = vunpack.c.l.b16 %v1421
    %v1753 = vunpack.c.h.b16 %v1421
    %v1754 = vunpack.c.l.b16 %v1422
    %v1755 = vunpack.c.h.b16 %v1422
    %v1756 = vunpack.c.l.b16 %v1423
    %v1757 = vunpack.c.h.b16 %v1423
    %v1758 = vunpack.c.l.b16 %v1424
    %v1759 = vunpack.c.h.b16 %v1424
    %v1760 = vunpack.c.l.b16 %v1425
    %v1761 = vunpack.c.h.b16 %v1425
    %v1762 = vunpack.c.l.b16 %v1426
    %v1763 = vunpack.c.h.b16 %v1426
    %v1764 = vunpack.c.l.b16 %v1427
    %v1765 = vunpack.c.h.b16 %v1427
    %v1766 = vunpack.c.l.b16 %v1428
    %v1767 = vunpack.c.h.b16 %v1428
    %v1768 = vunpack.c.l.b16 %v1429
    %v1769 = vunpack.c.h.b16 %v1429
    %v1770 = vunpack.c.l.b16 %v1430
    %v1771 = vunpack.c.h.b16 %v1430
    %v1772 = vunpack.c.l.b16 %v1431
    %v1773 = vunpack.c.h.b16 %v1431
    %v1774 = vunpack.c.l.b16 %v1432
    %v1775 = vunpack.c.h.b16 %v1432
    %v1776 = vunpack.c.l.b16 %v1433
    %v1777 = vunpack.c.h.b16 %v1433
    %v1778 = vunpack.c.l.b16 %v1434
    %v1779 = vunpack.c.h.b16 %v1434
    %v1780 = vunpack.c.l.b16 %v1435
    %v1781 = vunpack.c.h.b16 %v1435
    %v1782 = vunpack.c.l.b16 %v1436
    %v1783 = vunpack.c.h.b16 %v1436
    %v1784 = vunpack.c.l.b16 %v1437
    %v1785 = vunpack.c.h.b16 %v1437
    %v1786 = vunpack.c.l.b16 %v1438
    %v1787 = vunpack.c.h.b16 %v1438
    %v1788 = vunpack.c.l.b16 %v1439
    %v1789 = vunpack.c.h.b16 %v1439
    %v1790 = vunpack.c.l.b16 %v1440
    %v1791 = vunpack.c.h.b16 %v1440
    %v1792 = vunpack.c.l.b16 %v1441
    %v1793 = vunpack.c.h.b16 %v1441
    %v1794 = vunpack.c.l.b16 %v1442
    %v1795 = vunpack.c.h.b16 %v1442
    %v1796 = vunpack.c.l.b16 %v1443
    %v1797 = vunpack.c.h.b16 %v1443
    %v1798 = vunpack.c.l.b16 %v1444
    %v1799 = vunpack.c.h.b16 %v1444
    %v1800 = vunpack.c.l.b16 %v1445
    %v1801 = vunpack.c.h.b16 %v1445
    %v1802 = vunpack.c.l.b16 %v1446
    %v1803 = vunpack.c.h.b16 %v1446
    %v1804 = vunpack.c.l.b16 %v1447
    %v1805 = vunpack.c.h.b16 %v1447
    %v1806 = vunpack.c.l.b16 %v1448
    %v1807 = vunpack.c.h.b16 %v1448
    %v1808 = vunpack.c.l.b16 %v1449
    %v1809 = vunpack.c.h.b16 %v1449
    %v1810 = vunpack.c.l.b16 %v1450
    %v1811 = vunpack.c.h.b16 %v1450
    %v1812 = vunpack.c.l.b16 %v1451
    %v1813 = vunpack.c.h.b16 %v1451
    %v1814 = vunpack.c.l.b16 %v1452
    %v1815 = vunpack.c.h.b16 %v1452
    %v1816 = vunpack.c.l.b16 %v1453
    %v1817 = vunpack.c.h.b16 %v1453
    %v1818 = vunpack.c.l.b16 %v1454
    %v1819 = vunpack.c.h.b16 %v1454
    %v1820 = vunpack.c.l.b16 %v1455
    %v1821 = vunpack.c.h.b16 %v1455
    %v1822 = vunpack.c.l.b16 %v1456
    %v1823 = vunpack.c.h.b16 %v1456
    %v1824 = vunpack.c.l.b16 %v1457
    %v1825 = vunpack.c.h.b16 %v1457
    %v1826 = vunpack.c.l.b16 %v1458
    %v1827 = vunpack.c.h.b16 %v1458
    %v1828 = vunpack.c.l.b16 %v1459
    %v1829 = vunpack.c.h.b16 %v1459
    %v1830 = vunpack.c.l.b16 %v1460
    %v1831 = vunpack.c.h.b16 %v1460
    %v1832 = vunpack.c.l.b16 %v1461
    %v1833 = vunpack.c.h.b16 %v1461
    %v1834 = vunpack.c.l.b16 %v1462
    %v1835 = vunpack.c.h.b16 %v1462
    %v1836 = vunpack.c.l.b16 %v1463
    %v1837 = vunpack.c.h.b16 %v1463
    %v1838 = vunpack.c.l.b16 %v1464
    %v1839 = vunpack.c.h.b16 %v1464
    %v1840 = vunpack.c.l.b16 %v1465
    %v1841 = vunpack.c.h.b16 %v1465
    %v1842 = vunpack.c.l.b16 %v1466
    %v1843 = vunpack.c.h.b16 %v1466
    %v1844 = vunpack.c.l.b16 %v1467
    %v1845 = vunpack.c.h.b16 %v1467
    %v1846 = vunpack.c.l.b16 %v1468
    %v1847 = vunpack.c.h.b16 %v1468
    %v1848 = vunpack.c.l.b16 %v1469
    %v1849 = vunpack.c.h.b16 %v1469
    %v1850 = vunpack.c.l.b16 %v1470
    %v1851 = vunpack.c.h.b16 %v1470
    %v1852 = vunpack.c.l.b16 %v1471
    %v1853 = vunpack.c.h.b16 %v1471
    %v1854 = vunpack.c.l.b16 %v1472
    %v1855 = vunpack.c.h.b16 %v1472
    %v1856 = vunpack.c.l.b16 %v1473
    %v1857 = vunpack.c.h.b16 %v1473
    %v1858 = vunpack.c.l.b16 %v1474
    %v1859 = vunpack.c.h.b16 %v1474
    %v1860 = vunpack.c.l.b16 %v1475
    %v1861 = vunpack.c.h.b16 %v1475
    %v1862 = vunpack.c.l.b16 %v1476
    %v1863 = vunpack.c.h.b16 %v1476
    %v1864 = vunpack.c.l.b16 %v1477
    %v1865 = vunpack.c.h.b16 %v1477
    %v1866 = vunpack.c.l.b16 %v1478
    %v1867 = vunpack.c.h.b16 %v1478
    %v1868 = vunpack.c.l.b16 %v1479
    %v1869 = vunpack.c.h.b16 %v1479
    %v1870 = vunpack.c.l.b16 %v1480
    %v1871 = vunpack.c.h.b16 %v1480
    %v1872 = vunpack.c.l.b16 %v1481
    %v1873 = vunpack.c.h.b16 %v1481
    %v1874 = vunpack.c.l.b16 %v1482
    %v1875 = vunpack.c.h.b16 %v1482
    %v1876 = vunpack.c.l.b16 %v1483
    %v1877 = vunpack.c.h.b16 %v1483
    %v1878 = vunpack.c.l.b16 %v1484
    %v1879 = vunpack.c.h.b16 %v1484
    %v1880 = vunpack.c.l.b16 %v1485
    %v1881 = vunpack.c.h.b16 %v1485
    %v1882 = vunpack.c.l.b16 %v1486
    %v1883 = vunpack.c.h.b16 %v1486
    %v1884 = vunpack.c.l.b16 %v1487
    %v1885 = vunpack.c.h.b16 %v1487
    %v1886 = vunpack.c.l.b16 %v1488
    %v1887 = vunpack.c.h.b16 %v1488
    %v1888 = vunpack.c.l.b16 %v1489
    %v1889 = vunpack.c.h.b16 %v1489
    %v1890 = vunpack.c.l.b16 %v1490
    %v1891 = vunpack.c.h.b16 %v1490
    %v1892 = vunpack.c.l.b16 %v1491
    %v1893 = vunpack.c.h.b16 %v1491
    %v1894 = vunpack.c.l.b16 %v1492
    %v1895 = vunpack.c.h.b16 %v1492
    %v1896 = vunpack.c.l.b16 %v1493
    %v1897 = vunpack.c.h.b16 %v1493
    %v1898 = vunpack.c.l.b16 %v1494
    %v1899 = vunpack.c.h.b16 %v1494
    %v1900 = vunpack.c.l.b16 %v1495
    %v1901 = vunpack.c.h.b16 %v1495
    %v1902 = vpack.c.b16 %v1650, %v1646
    %v1903 = vpack.c.b16 %v1651, %v1647
    %v1904 = vpack.c.b16 %v1652, %v1648
    %v1905 = vpack.c.b16 %v1653, %v1649
    %v1906 = vpack.c.b16 %v1658, %v1654
    %v1907 = vpack.c.b16 %v1659, %v1655
    %v1908 = vpack.c.b16 %v1660, %v1656
    %v1909 = vpack.c.b16 %v1661, %v1657
    %v1910 = vpack.c.b16 %v1666, %v1662
    %v1911 = vpack.c.b16 %v1667, %v1663
    %v1912 = vpack.c.b16 %v1668, %v1664
    %v1913 = vpack.c.b16 %v1669, %v1665
    %v1914 = vpack.c.b16 %v1674, %v1670
    %v1915 = vpack.c.b16 %v1675, %v1671
    %v1916 = vpack.c.b16 %v1676, %v1672
    %v1917 = vpack.c.b16 %v1677, %v1673
    %v1918 = vpack.c.b16 %v1682, %v1678
    %v1919 = vpack.c.b16 %v1683, %v1679
    %v1920 = vpack.c.b16 %v1684, %v1680
    %v1921 = vpack.c.b16 %v1685, %v1681
    %v1922 = vpack.c.b16 %v1690, %v1686
    %v1923 = vpack.c.b16 %v1691, %v1687
    %v1924 = vpack.c.b16 %v1692, %v1688
    %v1925 = vpack.c.b16 %v1693, %v1689
    %v1926 = vpack.c.b16 %v1698, %v1694
    %v1927 = vpack.c.b16 %v1699, %v1695
    %v1928 = vpack.c.b16 %v1700, %v1696
    %v1929 = vpack.c.b16 %v1701, %v1697
    %v1930 = vpack.c.b16 %v1706, %v1702
    %v1931 = vpack.c.b16 %v1707, %v1703
    %v1932 = vpack.c.b16 %v1708, %v1704
    %v1933 = vpack.c.b16 %v1709, %v1705
    %v1934 = vpack.c.b16 %v1714, %v1710
    %v1935 = vpack.c.b16 %v1715, %v1711
    %v1936 = vpack.c.b16 %v1716, %v1712
    %v1937 = vpack.c.b16 %v1717, %v1713
    %v1938 = vpack.c.b16 %v1722, %v1718
    %v1939 = vpack.c.b16 %v1723, %v1719
    %v1940 = vpack.c.b16 %v1724, %v1720
    %v1941 = vpack.c.b16 %v1725, %v1721
    %v1942 = vpack.c.b16 %v1730, %v1726
    %v1943 = vpack.c.b16 %v1731, %v1727
    %v1944 = vpack.c.b16 %v1732, %v1728
    %v1945 = vpack.c.b16 %v1733, %v1729
    %v1946 = vpack.c.b16 %v1738, %v1734
    %v1947 = vpack.c.b16 %v1739, %v1735
    %v1948 = vpack.c.b16 %v1740, %v1736
    %v1949 = vpack.c.b16 %v1741, %v1737
    %v1950 = vpack.c.b16 %v1746, %v1742
    %v1951 = vpack.c.b16 %v1747, %v1743
    %v1952 = vpack.c.b16 %v1748, %v1744
    %v1953 = vpack.c.b16 %v1749, %v1745
    %v1954 = vpack.c.b16 %v1754, %v1750
    %v1955 = vpack.c.b16 %v1755, %v1751
    %v1956 = vpack.c.b16 %v1756, %v1752
    %v1957 = vpack.c.b16 %v1757, %v1753
    %v1958 = vpack.c.b16 %v1762, %v1758
    %v1959 = vpack.c.b16 %v1763, %v1759
    %v1960 = vpack.c.b16 %v1764, %v1760
    %v1961 = vpack.c.b16 %v1765, %v1761
    %v1962 = vpack.c.b16 %v1770, %v1766
    %v1963 = vpack.c.b16 %v1771, %v1767
    %v1964 = vpack.c.b16 %v1772, %v1768
    %v1965 = vpack.c.b16 %v1773, %v1769
    %v1966 = vpack.c.b16 %v1778, %v1774
    %v1967 = vpack.c.b16 %v1779, %v1775
    %v1968 = vpack.c.b16 %v1780, %v1776
    %v1969 = vpack.c.b16 %v1781, %v1777
    %v1970 = vpack.c.b16 %v1786, %v1782
    %v1971 = vpack.c.b16 %v1787, %v1783
    %v1972 = vpack.c.b16 %v1788, %v1784
    %v1973 = vpack.c.b16 %v1789, %v1785
    %v1974 = vpack.c.b16 %v1794, %v1790
    %v1975 = vpack.c.b16 %v1795, %v1791
    %v1976 = vpack.c.b16 %v1796, %v1792
    %v1977 = vpack.c.b16 %v1797, %v1793
    %v1978 = vpack.c.b16 %v1802, %v1798
    %v1979 = vpack.c.b16 %v1803, %v1799
    %v1980 = vpack.c.b16 %v1804, %v1800
    %v1981 = vpack.c.b16 %v1805, %v1801
    %v1982 = vpack.c.b16 %v1810, %v1806
    %v1983 = vpack.c.b16 %v1811, %v1807
    %v1984 = vpack.c.b16 %v1812, %v1808
    %v1985 = vpack.c.b16 %v1813, %v1809
    %v1986 = vpack.c.b16 %v1818, %v1814
    %v1987 = vpack.c.b16 %v1819, %v1815
    %v1988 = vpack.c.b16 %v1820, %v1816
    %v1989 = vpack.c.b16 %v1821, %v1817
    %v1990 = vpack.c.b16 %v1826, %v1822
    %v1991 = vpack.c.b16 %v1827, %v1823
    %v1992 = vpack.c.b16 %v1828, %v1824
    %v1993 = vpack.c.b16 %v1829, %v1825
    %v1994 = vpack.c.b16 %v1834, %v1830
    %v1995 = vpack.c.b16 %v1835, %v1831
    %v1996 = vpack.c.b16 %v1836, %v1832
    %v1997 = vpack.c.b16 %v1837, %v1833
    %v1998 = vpack.c.b16 %v1842, %v1838
    %v1999 = vpack.c.b16 %v1843, %v1839
    %v2000 = vpack.c.b16 %v1844, %v1840
    %v2001 = vpack.c.b16 %v1845, %v1841
    %v2002 = vpack.c.b16 %v1850, %v1846
    %v2003 = vpack.c.b16 %v1851, %v1847
    %v2004 = vpack.c.b16 %v1852, %v1848
    %v2005 = vpack.c.b16 %v1853, %v1849
    %v2006 = vpack.c.b16 %v1858, %v1854
    %v2007 = vpack.c.b16 %v1859, %v1855
    %v2008 = vpack.c.b16 %v1860, %v1856
    %v2009 = vpack.c.b16 %v1861, %v1857
    %v2010 = vpack.c.b16 %v1866, %v1862
    %v2011 = vpack.c.b16 %v1867, %v1863
    %v2012 = vpack.c.b16 %v1868, %v1864
    %v2013 = vpack.c.b16 %v1869, %v1865
    %v2014 = vpack.c.b16 %v1874, %v1870
    %v2015 = vpack.c.b16 %v1875, %v1871
    %v2016 = vpack.c.b16 %v1876, %v1872
    %v2017 = vpack.c.b16 %v1877, %v1873
    %v2018 = vpack.c.b16 %v1882, %v1878
    %v2019 = vpack.c.b16 %v1883, %v1879
    %v2020 = vpack.c.b16 %v1884, %v1880
    %v2021 = vpack.c.b16 %v1885, %v1881
    %v2022 = vpack.c.b16 %v1890, %v1886
    %v2023 = vpack.c.b16 %v1891, %v1887
    %v2024 = vpack.c.b16 %v1892, %v1888
    %v2025 = vpack.c.b16 %v1893, %v1889
    %v2026 = vpack.c.b16 %v1898, %v1894
    %v2027 = vpack.c.b16 %v1899, %v1895
    %v2028 = vpack.c.b16 %v1900, %v1896
    %v2029 = vpack.c.b16 %v1901, %v1897
    %2158 = vmatprep.subr.bf16.mxu0 %v1903
    %2159 = vmatpush1.bf16.msra.mxu0 %v1902
    %2160 = vmatprep.subr.bf16.mxu0 %v1907
    %2161 = vmatpush1.bf16.msra.mxu0 %v1906
    %2162 = vmatprep.subr.bf16.mxu0 %v1911
    %2163 = vmatpush1.bf16.msra.mxu0 %v1910
    %2164 = vmatprep.subr.bf16.mxu0 %v1915
    %2165 = vmatpush1.bf16.msra.mxu0 %v1914
    %2166 = vmatprep.subr.bf16.mxu0 %v1919
    %2167 = vmatpush1.bf16.msra.mxu0 %v1918
    %2168 = vmatprep.subr.bf16.mxu0 %v1923
    %2169 = vmatpush1.bf16.msra.mxu0 %v1922
    %2170 = vmatprep.subr.bf16.mxu0 %v1927
    %2171 = vmatpush1.bf16.msra.mxu0 %v1926
    %2172 = vmatprep.subr.bf16.mxu0 %v1931
    %2173 = vmatpush1.bf16.msra.mxu0 %v1930
    %2174 = vmatprep.subr.bf16.mxu0 %v1935
    %2175 = vmatpush1.bf16.msra.mxu0 %v1934
    %2176 = vmatprep.subr.bf16.mxu0 %v1939
    %2177 = vmatpush1.bf16.msra.mxu0 %v1938
    %2178 = vmatprep.subr.bf16.mxu0 %v1943
    %2179 = vmatpush1.bf16.msra.mxu0 %v1942
    %2180 = vmatprep.subr.bf16.mxu0 %v1947
    %2181 = vmatpush1.bf16.msra.mxu0 %v1946
    %2182 = vmatprep.subr.bf16.mxu0 %v1951
    %2183 = vmatpush1.bf16.msra.mxu0 %v1950
    %2184 = vmatprep.subr.bf16.mxu0 %v1955
    %2185 = vmatpush1.bf16.msra.mxu0 %v1954
    %2186 = vmatprep.subr.bf16.mxu0 %v1959
    %2187 = vmatpush1.bf16.msra.mxu0 %v1958
    %2188 = vmatprep.subr.bf16.mxu0 %v1963
    %2189 = vmatpush1.bf16.msra.mxu0 %v1962
    %2190 = vmatprep.mubr.bf16.mxu0 %v1365
    %2191 = vmatmul.mubr.bf16.gmra.mrb[0].mxu0 %v1364
    %v2192 = vpop.f32.mrb[0].mxu0
    %v2193 = vadd.f32 %v1501, %v2192
    %v2194 = vpop.f32.mrb[0].mxu0
    %v2195 = vadd.f32 %v1505, %v2194
    %v2196 = vpop.f32.mrb[0].mxu0
    %v2197 = vpop.f32.mrb[0].mxu0
    %2198 = vdwg.mxu0
    %2199 = vmatprep.subr.bf16.mxu0 %v1967
    %2200 = vmatpush1.bf16.msra.mxu0 %v1966
    %2201 = vmatprep.subr.bf16.mxu0 %v1971
    %2202 = vmatpush1.bf16.msra.mxu0 %v1970
    %2203 = vmatprep.subr.bf16.mxu0 %v1975
    %2204 = vmatpush1.bf16.msra.mxu0 %v1974
    %2205 = vmatprep.subr.bf16.mxu0 %v1979
    %2206 = vmatpush1.bf16.msra.mxu0 %v1978
    %2207 = vmatprep.subr.bf16.mxu0 %v1983
    %2208 = vmatpush1.bf16.msra.mxu0 %v1982
    %2209 = vmatprep.subr.bf16.mxu0 %v1987
    %2210 = vmatpush1.bf16.msra.mxu0 %v1986
    %2211 = vmatprep.subr.bf16.mxu0 %v1991
    %2212 = vmatpush1.bf16.msra.mxu0 %v1990
    %2213 = vmatprep.subr.bf16.mxu0 %v1995
    %2214 = vmatpush1.bf16.msra.mxu0 %v1994
    %2215 = vmatprep.subr.bf16.mxu0 %v1999
    %2216 = vmatpush1.bf16.msra.mxu0 %v1998
    %2217 = vmatprep.subr.bf16.mxu0 %v2003
    %2218 = vmatpush1.bf16.msra.mxu0 %v2002
    %2219 = vmatprep.subr.bf16.mxu0 %v2007
    %2220 = vmatpush1.bf16.msra.mxu0 %v2006
    %2221 = vmatprep.subr.bf16.mxu0 %v2011
    %2222 = vmatpush1.bf16.msra.mxu0 %v2010
    %2223 = vmatprep.subr.bf16.mxu0 %v2015
    %2224 = vmatpush1.bf16.msra.mxu0 %v2014
    %2225 = vmatprep.subr.bf16.mxu0 %v2019
    %2226 = vmatpush1.bf16.msra.mxu0 %v2018
    %2227 = vmatprep.subr.bf16.mxu0 %v2023
    %2228 = vmatpush1.bf16.msra.mxu0 %v2022
    %2229 = vmatprep.subr.bf16.mxu0 %v2027
    %2230 = vmatpush1.bf16.msra.mxu0 %v2026
    %2231 = vmatprep.mubr.bf16.mxu0 %v1367
    %2232 = vmatmul.mubr.bf16.gmra.mrb[0].mxu0 %v1366
    %v2233 = vpop.f32.mrb[0].mxu0
    %v2234 = vadd.f32 %v2193, %v2233
    %v2235 = vpop.f32.mrb[0].mxu0
    %v2236 = vadd.f32 %v2195, %v2235
    %v2237 = vpop.f32.mrb[0].mxu0
    %v2238 = vpop.f32.mrb[0].mxu0
    %2239 = vdwg.mxu0
    %2240 = vmatprep.subr.bf16.mxu0 %v1905
    %2241 = vmatpush1.bf16.msra.mxu0 %v1904
    %2242 = vmatprep.subr.bf16.mxu0 %v1909
    %2243 = vmatpush1.bf16.msra.mxu0 %v1908
    %2244 = vmatprep.subr.bf16.mxu0 %v1913
    %2245 = vmatpush1.bf16.msra.mxu0 %v1912
    %2246 = vmatprep.subr.bf16.mxu0 %v1917
    %2247 = vmatpush1.bf16.msra.mxu0 %v1916
    %2248 = vmatprep.subr.bf16.mxu0 %v1921
    %2249 = vmatpush1.bf16.msra.mxu0 %v1920
    %2250 = vmatprep.subr.bf16.mxu0 %v1925
    %2251 = vmatpush1.bf16.msra.mxu0 %v1924
    %2252 = vmatprep.subr.bf16.mxu0 %v1929
    %2253 = vmatpush1.bf16.msra.mxu0 %v1928
    %2254 = vmatprep.subr.bf16.mxu0 %v1933
    %2255 = vmatpush1.bf16.msra.mxu0 %v1932
    %2256 = vmatprep.subr.bf16.mxu0 %v1937
    %2257 = vmatpush1.bf16.msra.mxu0 %v1936
    %2258 = vmatprep.subr.bf16.mxu0 %v1941
    %2259 = vmatpush1.bf16.msra.mxu0 %v1940
    %2260 = vmatprep.subr.bf16.mxu0 %v1945
    %2261 = vmatpush1.bf16.msra.mxu0 %v1944
    %2262 = vmatprep.subr.bf16.mxu0 %v1949
    %2263 = vmatpush1.bf16.msra.mxu0 %v1948
    %2264 = vmatprep.subr.bf16.mxu0 %v1953
    %2265 = vmatpush1.bf16.msra.mxu0 %v1952
    %2266 = vmatprep.subr.bf16.mxu0 %v1957
    %2267 = vmatpush1.bf16.msra.mxu0 %v1956
    %2268 = vmatprep.subr.bf16.mxu0 %v1961
    %2269 = vmatpush1.bf16.msra.mxu0 %v1960
    %2270 = vmatprep.subr.bf16.mxu0 %v1965
    %2271 = vmatpush1.bf16.msra.mxu0 %v1964
    %2272 = vmatprep.mubr.bf16.mxu0 %v1365
    %2273 = vmatmul.mubr.bf16.gmra.mrb[0].mxu0 %v1364
    %v2274 = vpop.f32.mrb[0].mxu0
    %v2275 = vadd.f32 %v1509, %v2274
    %v2276 = vpop.f32.mrb[0].mxu0
    %v2277 = vadd.f32 %v1513, %v2276
    %v2278 = vpop.f32.mrb[0].mxu0
    %v2279 = vpop.f32.mrb[0].mxu0
    %2280 = vdwg.mxu0
    %2281 = vmatprep.subr.bf16.mxu0 %v1969
    %2282 = vmatpush1.bf16.msra.mxu0 %v1968
    %2283 = vmatprep.subr.bf16.mxu0 %v1973
    %2284 = vmatpush1.bf16.msra.mxu0 %v1972
    %2285 = vmatprep.subr.bf16.mxu0 %v1977
    %2286 = vmatpush1.bf16.msra.mxu0 %v1976
    %2287 = vmatprep.subr.bf16.mxu0 %v1981
    %2288 = vmatpush1.bf16.msra.mxu0 %v1980
    %2289 = vmatprep.subr.bf16.mxu0 %v1985
    %2290 = vmatpush1.bf16.msra.mxu0 %v1984
    %2291 = vmatprep.subr.bf16.mxu0 %v1989
    %2292 = vmatpush1.bf16.msra.mxu0 %v1988
    %2293 = vmatprep.subr.bf16.mxu0 %v1993
    %2294 = vmatpush1.bf16.msra.mxu0 %v1992
    %2295 = vmatprep.subr.bf16.mxu0 %v1997
    %2296 = vmatpush1.bf16.msra.mxu0 %v1996
    %2297 = vmatprep.subr.bf16.mxu0 %v2001
    %2298 = vmatpush1.bf16.msra.mxu0 %v2000
    %2299 = vmatprep.subr.bf16.mxu0 %v2005
    %2300 = vmatpush1.bf16.msra.mxu0 %v2004
    %2301 = vmatprep.subr.bf16.mxu0 %v2009
    %2302 = vmatpush1.bf16.msra.mxu0 %v2008
    %2303 = vmatprep.subr.bf16.mxu0 %v2013
    %2304 = vmatpush1.bf16.msra.mxu0 %v2012
    %2305 = vmatprep.subr.bf16.mxu0 %v2017
    %2306 = vmatpush1.bf16.msra.mxu0 %v2016
    %2307 = vmatprep.subr.bf16.mxu0 %v2021
    %2308 = vmatpush1.bf16.msra.mxu0 %v2020
    %2309 = vmatprep.subr.bf16.mxu0 %v2025
    %2310 = vmatpush1.bf16.msra.mxu0 %v2024
    %2311 = vmatprep.subr.bf16.mxu0 %v2029
    %2312 = vmatpush1.bf16.msra.mxu0 %v2028
    %2313 = vmatprep.mubr.bf16.mxu0 %v1367
    %2314 = vmatmul.mubr.bf16.gmra.mrb[0].mxu0 %v1366
    %v2315 = vpop.f32.mrb[0].mxu0
    %v2316 = vadd.f32 %v2275, %v2315
    %v2317 = vpop.f32.mrb[0].mxu0
    %v2318 = vadd.f32 %v2277, %v2317
    %v2319 = vpop.f32.mrb[0].mxu0
    %v2320 = vpop.f32.mrb[0].mxu0
    %2321 = vdwg.mxu0
    %v2322 = vmax.f32 %v2234, 0.0
    %v2323 = vmax.f32 %v2236, 0.0
    %v2324 = vmax.f32 %v2316, 0.0
    %v2325 = vmax.f32 %v2318, 0.0
    %v2326 = vpack.c.bf16 %v2322, %v2322
    %v2327 = vpack.c.bf16 %v2323, %v2323
    %v2328 = vpack.c.bf16 %v2324, %v2324
    %v2329 = vpack.c.bf16 %v2325, %v2325
    %v2330 = vld [vmem:[#allocation10] sm:$0xf]
    %v2331 = vld [vmem:[#allocation10 + $0x4] sm:$0xf]
    %v2332 = vld [vmem:[#allocation10 + $0x8] sm:$0xf]
    %v2333 = vld [vmem:[#allocation10 + $0xc] sm:$0xf]
    %v2334 = vld [vmem:[#allocation10 + $0x10] sm:$0xf]
    %v2335 = vld [vmem:[#allocation10 + $0x14] sm:$0xf]
    %v2336 = vld [vmem:[#allocation10 + $0x18] sm:$0xf]
    %v2337 = vld [vmem:[#allocation10 + $0x1c] sm:$0xf]
    %v2338 = vld [vmem:[#allocation10 + $0x20] sm:$0xf]
    %v2339 = vld [vmem:[#allocation10 + $0x24] sm:$0xf]
    %v2340 = vld [vmem:[#allocation10 + $0x28] sm:$0xf]
    %v2341 = vld [vmem:[#allocation10 + $0x2c] sm:$0xf]
    %v2342 = vld [vmem:[#allocation10 + $0x30] sm:$0xf]
    %v2343 = vld [vmem:[#allocation10 + $0x34] sm:$0xf]
    %v2344 = vld [vmem:[#allocation10 + $0x38] sm:$0xf]
    %v2345 = vld [vmem:[#allocation10 + $0x3c] sm:$0xf]
    %v2346 = vld [vmem:[#allocation10 + $0x40] sm:$0xf]
    %v2347 = vld [vmem:[#allocation10 + $0x44] sm:$0xf]
    %v2348 = vld [vmem:[#allocation10 + $0x48] sm:$0xf]
    %v2349 = vld [vmem:[#allocation10 + $0x4c] sm:$0xf]
    %v2350 = vld [vmem:[#allocation10 + $0x50] sm:$0xf]
    %v2351 = vld [vmem:[#allocation10 + $0x54] sm:$0xf]
    %v2352 = vld [vmem:[#allocation10 + $0x58] sm:$0xf]
    %v2353 = vld [vmem:[#allocation10 + $0x5c] sm:$0xf]
    %v2354 = vld [vmem:[#allocation10 + $0x60] sm:$0xf]
    %v2355 = vld [vmem:[#allocation10 + $0x64] sm:$0xf]
    %v2356 = vld [vmem:[#allocation10 + $0x68] sm:$0xf]
    %v2357 = vld [vmem:[#allocation10 + $0x6c] sm:$0xf]
    %v2358 = vld [vmem:[#allocation10 + $0x70] sm:$0xf]
    %v2359 = vld [vmem:[#allocation10 + $0x74] sm:$0xf]
    %v2360 = vld [vmem:[#allocation10 + $0x78] sm:$0xf]
    %v2361 = vld [vmem:[#allocation10 + $0x7c] sm:$0xf]
    %v2362 = vld [vmem:[#allocation10 + $0x80] sm:$0xf]
    %v2363 = vld [vmem:[#allocation10 + $0x84] sm:$0xf]
    %v2364 = vld [vmem:[#allocation10 + $0x88] sm:$0xf]
    %v2365 = vld [vmem:[#allocation10 + $0x8c] sm:$0xf]
    %v2366 = vld [vmem:[#allocation10 + $0x90] sm:$0xf]
    %v2367 = vld [vmem:[#allocation10 + $0x94] sm:$0xf]
    %v2368 = vld [vmem:[#allocation10 + $0x98] sm:$0xf]
    %v2369 = vld [vmem:[#allocation10 + $0x9c] sm:$0xf]
    %v2370 = vld [vmem:[#allocation10 + $0xa0] sm:$0xf]
    %v2371 = vld [vmem:[#allocation10 + $0xa4] sm:$0xf]
    %v2372 = vld [vmem:[#allocation10 + $0xa8] sm:$0xf]
    %v2373 = vld [vmem:[#allocation10 + $0xac] sm:$0xf]
    %v2374 = vld [vmem:[#allocation10 + $0xb0] sm:$0xf]
    %v2375 = vld [vmem:[#allocation10 + $0xb4] sm:$0xf]
    %v2376 = vld [vmem:[#allocation10 + $0xb8] sm:$0xf]
    %v2377 = vld [vmem:[#allocation10 + $0xbc] sm:$0xf]
    %v2378 = vld [vmem:[#allocation10 + $0xc0] sm:$0xf]
    %v2379 = vld [vmem:[#allocation10 + $0xc4] sm:$0xf]
    %v2380 = vld [vmem:[#allocation10 + $0xc8] sm:$0xf]
    %v2381 = vld [vmem:[#allocation10 + $0xcc] sm:$0xf]
    %v2382 = vld [vmem:[#allocation10 + $0xd0] sm:$0xf]
    %v2383 = vld [vmem:[#allocation10 + $0xd4] sm:$0xf]
    %v2384 = vld [vmem:[#allocation10 + $0xd8] sm:$0xf]
    %v2385 = vld [vmem:[#allocation10 + $0xdc] sm:$0xf]
    %v2386 = vld [vmem:[#allocation10 + $0xe0] sm:$0xf]
    %v2387 = vld [vmem:[#allocation10 + $0xe4] sm:$0xf]
    %v2388 = vld [vmem:[#allocation10 + $0xe8] sm:$0xf]
    %v2389 = vld [vmem:[#allocation10 + $0xec] sm:$0xf]
    %v2390 = vld [vmem:[#allocation10 + $0xf0] sm:$0xf]
    %v2391 = vld [vmem:[#allocation10 + $0xf4] sm:$0xf]
    %v2392 = vld [vmem:[#allocation10 + $0xf8] sm:$0xf]
    %v2393 = vld [vmem:[#allocation10 + $0xfc] sm:$0xf]
    %v2394 = vld [vmem:[%s8] sm:$0x1]
    %v2396 = vlaneseq
    %v2397 = vshrl.u32 %v2396, 7
    %v2398 = vsub.s32 0, %v2397
    %v2399 = vrot.slane %v2394, %v2398
    %v2465 = vunpack.c.l.b16 %v2330
    %v2466 = vunpack.c.l.b16 %v2331
    %v2467 = vunpack.c.l.b16 %v2332
    %v2468 = vunpack.c.l.b16 %v2333
    %v2469 = vunpack.c.l.b16 %v2334
    %v2470 = vunpack.c.l.b16 %v2335
    %v2471 = vunpack.c.l.b16 %v2336
    %v2472 = vunpack.c.l.b16 %v2337
    %v2473 = vunpack.c.l.b16 %v2338
    %v2474 = vunpack.c.l.b16 %v2339
    %v2475 = vunpack.c.l.b16 %v2340
    %v2476 = vunpack.c.l.b16 %v2341
    %v2477 = vunpack.c.l.b16 %v2342
    %v2478 = vunpack.c.l.b16 %v2343
    %v2479 = vunpack.c.l.b16 %v2344
    %v2480 = vunpack.c.l.b16 %v2345
    %v2481 = vunpack.c.l.b16 %v2346
    %v2482 = vunpack.c.l.b16 %v2347
    %v2483 = vunpack.c.l.b16 %v2348
    %v2484 = vunpack.c.l.b16 %v2349
    %v2485 = vunpack.c.l.b16 %v2350
    %v2486 = vunpack.c.l.b16 %v2351
    %v2487 = vunpack.c.l.b16 %v2352
    %v2488 = vunpack.c.l.b16 %v2353
    %v2489 = vunpack.c.l.b16 %v2354
    %v2490 = vunpack.c.l.b16 %v2355
    %v2491 = vunpack.c.l.b16 %v2356
    %v2492 = vunpack.c.l.b16 %v2357
    %v2493 = vunpack.c.l.b16 %v2358
    %v2494 = vunpack.c.l.b16 %v2359
    %v2495 = vunpack.c.l.b16 %v2360
    %v2496 = vunpack.c.l.b16 %v2361
    %v2497 = vunpack.c.l.b16 %v2362
    %v2498 = vunpack.c.l.b16 %v2363
    %v2499 = vunpack.c.l.b16 %v2364
    %v2500 = vunpack.c.l.b16 %v2365
    %v2501 = vunpack.c.l.b16 %v2366
    %v2502 = vunpack.c.l.b16 %v2367
    %v2503 = vunpack.c.l.b16 %v2368
    %v2504 = vunpack.c.l.b16 %v2369
    %v2505 = vunpack.c.l.b16 %v2370
    %v2506 = vunpack.c.l.b16 %v2371
    %v2507 = vunpack.c.l.b16 %v2372
    %v2508 = vunpack.c.l.b16 %v2373
    %v2509 = vunpack.c.l.b16 %v2374
    %v2510 = vunpack.c.l.b16 %v2375
    %v2511 = vunpack.c.l.b16 %v2376
    %v2512 = vunpack.c.l.b16 %v2377
    %v2513 = vunpack.c.l.b16 %v2378
    %v2514 = vunpack.c.l.b16 %v2379
    %v2515 = vunpack.c.l.b16 %v2380
    %v2516 = vunpack.c.l.b16 %v2381
    %v2517 = vunpack.c.l.b16 %v2382
    %v2518 = vunpack.c.l.b16 %v2383
    %v2519 = vunpack.c.l.b16 %v2384
    %v2520 = vunpack.c.l.b16 %v2385
    %v2521 = vunpack.c.l.b16 %v2386
    %v2522 = vunpack.c.l.b16 %v2387
    %v2523 = vunpack.c.l.b16 %v2388
    %v2524 = vunpack.c.l.b16 %v2389
    %v2525 = vunpack.c.l.b16 %v2390
    %v2526 = vunpack.c.l.b16 %v2391
    %v2527 = vunpack.c.l.b16 %v2392
    %v2528 = vunpack.c.l.b16 %v2393
    %v2529 = vpack.c.b16 %v2466, %v2465
    %v2530 = vpack.c.b16 %v2468, %v2467
    %v2531 = vpack.c.b16 %v2470, %v2469
    %v2532 = vpack.c.b16 %v2472, %v2471
    %v2533 = vpack.c.b16 %v2474, %v2473
    %v2534 = vpack.c.b16 %v2476, %v2475
    %v2535 = vpack.c.b16 %v2478, %v2477
    %v2536 = vpack.c.b16 %v2480, %v2479
    %v2537 = vpack.c.b16 %v2482, %v2481
    %v2538 = vpack.c.b16 %v2484, %v2483
    %v2539 = vpack.c.b16 %v2486, %v2485
    %v2540 = vpack.c.b16 %v2488, %v2487
    %v2541 = vpack.c.b16 %v2490, %v2489
    %v2542 = vpack.c.b16 %v2492, %v2491
    %v2543 = vpack.c.b16 %v2494, %v2493
    %v2544 = vpack.c.b16 %v2496, %v2495
    %v2545 = vpack.c.b16 %v2498, %v2497
    %v2546 = vpack.c.b16 %v2500, %v2499
    %v2547 = vpack.c.b16 %v2502, %v2501
    %v2548 = vpack.c.b16 %v2504, %v2503
    %v2549 = vpack.c.b16 %v2506, %v2505
    %v2550 = vpack.c.b16 %v2508, %v2507
    %v2551 = vpack.c.b16 %v2510, %v2509
    %v2552 = vpack.c.b16 %v2512, %v2511
    %v2553 = vpack.c.b16 %v2514, %v2513
    %v2554 = vpack.c.b16 %v2516, %v2515
    %v2555 = vpack.c.b16 %v2518, %v2517
    %v2556 = vpack.c.b16 %v2520, %v2519
    %v2557 = vpack.c.b16 %v2522, %v2521
    %v2558 = vpack.c.b16 %v2524, %v2523
    %v2559 = vpack.c.b16 %v2526, %v2525
    %v2560 = vpack.c.b16 %v2528, %v2527
    %2593 = vmatprep.subr.bf16.mxu0 0
    %2594 = vmatpush1.bf16.msra.mxu0 %v2529
    %2595 = vmatprep.subr.bf16.mxu0 0
    %2596 = vmatpush1.bf16.msra.mxu0 %v2530
    %2597 = vmatprep.subr.bf16.mxu0 0
    %2598 = vmatpush1.bf16.msra.mxu0 %v2531
    %2599 = vmatprep.subr.bf16.mxu0 0
    %2600 = vmatpush1.bf16.msra.mxu0 %v2532
    %2601 = vmatprep.subr.bf16.mxu0 0
    %2602 = vmatpush1.bf16.msra.mxu0 %v2533
    %2603 = vmatprep.subr.bf16.mxu0 0
    %2604 = vmatpush1.bf16.msra.mxu0 %v2534
    %2605 = vmatprep.subr.bf16.mxu0 0
    %2606 = vmatpush1.bf16.msra.mxu0 %v2535
    %2607 = vmatprep.subr.bf16.mxu0 0
    %2608 = vmatpush1.bf16.msra.mxu0 %v2536
    %2609 = vmatprep.subr.bf16.mxu0 0
    %2610 = vmatpush1.bf16.msra.mxu0 %v2537
    %2611 = vmatprep.subr.bf16.mxu0 0
    %2612 = vmatpush1.bf16.msra.mxu0 %v2538
    %2613 = vmatprep.subr.bf16.mxu0 0
    %2614 = vmatpush1.bf16.msra.mxu0 %v2539
    %2615 = vmatprep.subr.bf16.mxu0 0
    %2616 = vmatpush1.bf16.msra.mxu0 %v2540
    %2617 = vmatprep.subr.bf16.mxu0 0
    %2618 = vmatpush1.bf16.msra.mxu0 %v2541
    %2619 = vmatprep.subr.bf16.mxu0 0
    %2620 = vmatpush1.bf16.msra.mxu0 %v2542
    %2621 = vmatprep.subr.bf16.mxu0 0
    %2622 = vmatpush1.bf16.msra.mxu0 %v2543
    %2623 = vmatprep.subr.bf16.mxu0 0
    %2624 = vmatpush1.bf16.msra.mxu0 %v2544
    %2625 = vmatprep.mubr.bf16.mxu0 %v2327
    %2626 = vmatmul.mubr.bf16.gmra.mrb[0].mxu0 %v2326
    %v2627 = vpop.f32.mrb[0].mxu0
    %v2628 = vadd.f32 %v2399, %v2627
    %v2629 = vpop.f32.mrb[0].mxu0
    %v2630 = vpop.f32.mrb[0].mxu0
    %v2631 = vpop.f32.mrb[0].mxu0
    %2632 = vdwg.mxu0
    %2633 = vmatprep.subr.bf16.mxu0 0
    %2634 = vmatpush1.bf16.msra.mxu0 %v2545
    %2635 = vmatprep.subr.bf16.mxu0 0
    %2636 = vmatpush1.bf16.msra.mxu0 %v2546
    %2637 = vmatprep.subr.bf16.mxu0 0
    %2638 = vmatpush1.bf16.msra.mxu0 %v2547
    %2639 = vmatprep.subr.bf16.mxu0 0
    %2640 = vmatpush1.bf16.msra.mxu0 %v2548
    %2641 = vmatprep.subr.bf16.mxu0 0
    %2642 = vmatpush1.bf16.msra.mxu0 %v2549
    %2643 = vmatprep.subr.bf16.mxu0 0
    %2644 = vmatpush1.bf16.msra.mxu0 %v2550
    %2645 = vmatprep.subr.bf16.mxu0 0
    %2646 = vmatpush1.bf16.msra.mxu0 %v2551
    %2647 = vmatprep.subr.bf16.mxu0 0
    %2648 = vmatpush1.bf16.msra.mxu0 %v2552
    %2649 = vmatprep.subr.bf16.mxu0 0
    %2650 = vmatpush1.bf16.msra.mxu0 %v2553
    %2651 = vmatprep.subr.bf16.mxu0 0
    %2652 = vmatpush1.bf16.msra.mxu0 %v2554
    %2653 = vmatprep.subr.bf16.mxu0 0
    %2654 = vmatpush1.bf16.msra.mxu0 %v2555
    %2655 = vmatprep.subr.bf16.mxu0 0
    %2656 = vmatpush1.bf16.msra.mxu0 %v2556
    %2657 = vmatprep.subr.bf16.mxu0 0
    %2658 = vmatpush1.bf16.msra.mxu0 %v2557
    %2659 = vmatprep.subr.bf16.mxu0 0
    %2660 = vmatpush1.bf16.msra.mxu0 %v2558
    %2661 = vmatprep.subr.bf16.mxu0 0
    %2662 = vmatpush1.bf16.msra.mxu0 %v2559
    %2663 = vmatprep.subr.bf16.mxu0 0
    %2664 = vmatpush1.bf16.msra.mxu0 %v2560
    %2665 = vmatprep.mubr.bf16.mxu0 %v2329
    %2666 = vmatmul.mubr.bf16.gmra.mrb[0].mxu0 %v2328
    %v2667 = vpop.f32.mrb[0].mxu0
    %v2668 = vadd.f32 %v2628, %v2667
    %v2669 = vpop.f32.mrb[0].mxu0
    %v2670 = vpop.f32.mrb[0].mxu0
    %v2671 = vpop.f32.mrb[0].mxu0
    %2672 = vdwg.mxu0
    %2673 = vst [vmem:[#allocation11] sm:$0xff] %v2668
    // Predicated region
    $region58: #{tpu_custom_call.1} parent=1 // pred_check
      _
    $region59: #{tpu_custom_call.1} parent=1 // pred_check_branch
      %2675 = sbr.rel (0) target = $region61
    $region60: #{tpu_custom_call.1} parent=1 // pred_region
      %s2677 = ssub.s32 128, 128
      %2678 = vsyncadd [#allocation4], %s2677
      %s2680 = sshll.u32 [#allocation11], 4
      %s2681 = int_to_ptr.vmem [resolvable:$true] %s2680
      %2683 = dma.vmem_to_hbm [thread:$0]  %s2681, 128, %s9, [#allocation4]
    $region61: #{tpu_custom_call.1} parent=1 // pred_fallthru
      _
    // Predicated region
    $region62: #{tpu_custom_call.1} parent=1 // pred_check
      _
    $region63: #{tpu_custom_call.1} parent=1 // pred_check_branch
      %2685 = sbr.rel (0) target = $region65
    $region64: #{tpu_custom_call.1} parent=1 // pred_region
      %2686 = dma.done [#allocation4], 128
    $region65: #{tpu_custom_call.1} parent=1 // pred_fallthru
      _
    %2687 = vsyncpa [#allocation3], 1
    %2688 = vsyncpa [#allocation6], 1
    %2689 = vsyncpa [#allocation9], 1
    %2690 = vsyncpa [#allocation4], 1

</llo_original>
